<compile_context>
chip_gen: v5e
topology: v5e:2x2
jax: 0.10.0
libtpu: 0.0.40
codegen_flags: <defaults>
</compile_context>

<pallas_src>
import jax
import jax.numpy as jnp
from jax.experimental import pallas as pl
from jax.experimental.pallas import tpu as pltpu

BN_EPS = 1e-5


def conv_module_kernel(x_ref, xl_ref, xr_ref, w1_ref, b1_ref, wd_ref, bd_ref,
                       w2_ref, b2_ref, o_ref, xext_ref, yext_ref):
    t = pl.program_id(1)
    n_t = pl.num_programs(1)

    TT = o_ref.shape[1]
    C = o_ref.shape[2]
    K = wd_ref.shape[0]
    PH = xl_ref.shape[1]                 # sublane-aligned halo (>= (K-1)//2)
    P = (K - 1) // 2
    OFF = PH - P

    # ---- assemble [left halo | center | right halo] (all 8-row aligned) ----
    xext_ref[0:PH, :] = xl_ref[0]
    xext_ref[PH:PH + TT, :] = x_ref[0]
    xext_ref[PH + TT:, :] = xr_ref[0]

    # ---- fused pointwise_conv1 + GLU: one bf16 MXU pass over extended tile ----
    h = jnp.dot(xext_ref[...].astype(jnp.bfloat16), w1_ref[...],
                preferred_element_type=jnp.float32) + b1_ref[...]   # (TT+2PH, 2C)
    yext_ref[...] = h[:, :C] * jax.nn.sigmoid(h[:, C:])             # (TT+2PH, C)

    # Depthwise conv zero-pads y outside [0, T): blank the out-of-range halo.
    # (Only at sequence-boundary tiles; scratch is fully rewritten each step,
    #  so this is safe under "parallel" grid semantics.)
    @pl.when(t == 0)
    def _():
        yext_ref[0:PH, :] = jnp.zeros((PH, C), jnp.float32)

    @pl.when(t == n_t - 1)
    def _():
        yext_ref[PH + TT:, :] = jnp.zeros((PH, C), jnp.float32)

    # ---- depthwise conv (inference BN folded into wd/bd) + ReLU ----
    wd = wd_ref[...]                     # (K, C) hoisted once
    acc = jnp.zeros((TT, C), jnp.float32) + bd_ref[...]
    for k in range(K):                   # static unroll (K = 15)
        # NOTE: slice starts OFF+k are not multiples of 8; the sublane shift is
        # handled by the XLU, which is otherwise idle in this stage.
        acc = acc + yext_ref[OFF + k:OFF + k + TT, :] * wd[k:k + 1, :]
    z = jnp.maximum(acc, 0.0)

    # ---- pointwise_conv2 (bf16 MXU) ----
    out = jnp.dot(z.astype(jnp.bfloat16), w2_ref[...],
                  preferred_element_type=jnp.float32) + b2_ref[...]
    o_ref[0] = out.astype(o_ref.dtype)


def convolution_module_forward(x, params, kernel_size, time_tile=None):
    """x: (B, T, C) float32.  Returns (out (B, T, C), new_cache (0,0,0))."""
    B, T, C = x.shape
    K = kernel_size
    assert (K - 1) % 2 == 0
    P = (K - 1) // 2
    PH = ((P + 7) // 8) * 8              # sublane-aligned halo depth

    if time_tile is None:
        time_tile = min(T, 256)
        if T % time_tile != 0:
            time_tile = T
    TT = time_tile
    assert T % TT == 0 and TT % PH == 0 and T % PH == 0 and TT >= PH
    n_t = T // TT
    n_ph = T // PH
    tt_ph = TT // PH

    (ada_s, ada_b, w1a, b1a, w1g, b1g, wd, bd,
     gamma, beta, mean, var, w2, b2) = params

    # ---------- one-time wrapper-side constant folding ----------
    # Fuse the two GLU matmuls into one (C, 2C) weight.
    w1_cat = jnp.concatenate([w1a, w1g], axis=1)          # (C, 2C)
    b1_cat = jnp.concatenate([b1a, b1g], axis=1)          # (1, 2C)
    # Fold adaptive scale/bias into conv1: (s*x+b)@W = x@(diag(s)W) + (b@W).
    b1_f = b1_cat + jnp.dot(ada_b, w1_cat)                # (1, 2C)
    w1_f = ada_s.reshape(C, 1) * w1_cat                   # (C, 2C)
    # Fold inference BatchNorm into the depthwise conv.
    s = gamma * jax.lax.rsqrt(var + BN_EPS)               # (1, C)
    wd_f = wd * s                                         # (K, C)
    bd_f = bd * s + beta - mean * s                       # (1, C)
    # bf16 weights for the MXU; biases stay f32.
    w1_bf = w1_f.astype(jnp.bfloat16)
    w2_bf = w2.astype(jnp.bfloat16)

    def full(shp):
        return pl.BlockSpec(shp, lambda b, t: (0,) * len(shp))

    grid_spec = pltpu.PrefetchScalarGridSpec(
        num_scalar_prefetch=0,
        grid=(B, n_t),
        in_specs=[
            # center x tile
            pl.BlockSpec((1, TT, C), lambda b, t: (b, t, 0)),
            # left halo: PH rows ending at t*TT (clamped; zeroed at t == 0)
            pl.BlockSpec((1, PH, C),
                         lambda b, t: (b, jnp.maximum(t * tt_ph - 1, 0), 0)),
            # right halo: PH rows starting at (t+1)*TT (clamped; zeroed at last t)
            pl.BlockSpec((1, PH, C),
                         lambda b, t: (b, jnp.minimum((t + 1) * tt_ph, n_ph - 1), 0)),
            full((C, 2 * C)),                                   # fused conv1 w (bf16)
            full((1, 2 * C)),                                   # fused conv1 b
            full((K, C)),                                       # depthwise w (BN folded)
            full((1, C)),                                       # depthwise b (BN folded)
            full((C, C)),                                       # conv2 w (bf16)
            full((1, C)),                                       # conv2 b
        ],
        out_specs=pl.BlockSpec((1, TT, C), lambda b, t: (b, t, 0)),
        scratch_shapes=[
            pltpu.VMEM((TT + 2 * PH, C), jnp.float32),          # extended x tile
            pltpu.VMEM((TT + 2 * PH, C), jnp.float32),          # padded GLU output
        ],
    )

    cost = pl.CostEstimate(
        flops=int(2 * B * T * C * (2 * C) + 2 * B * T * C * C + 2 * B * T * C * K),
        transcendentals=int(B * T * C),
        bytes_accessed=int(B * T * C * 4 * (1 + 2 * PH / TT)    # x tiles + halos
                           + B * T * C * 4                      # out
                           + C * 2 * C * 2 + C * C * 2          # bf16 weights
                           + (2 * C + K * C + 3 * C) * 4),
    )

    out = pl.pallas_call(
        conv_module_kernel,
        out_shape=jax.ShapeDtypeStruct((B, T, C), x.dtype),
        grid_spec=grid_spec,
        compiler_params=pltpu.CompilerParams(
            dimension_semantics=("parallel", "parallel"),
            vmem_limit_bytes=32 * 1024 * 1024),
        cost_estimate=cost,
    )(x, x, x, w1_bf, b1_f, wd_f, bd_f, w2_bf, b2)

    new_cache = jnp.zeros((0, 0, 0), dtype=x.dtype)   # non-causal -> empty cache
    return out, new_cache


def init_params(key, channels, kernel_size):
    """Deterministic synthetic parameters, shaped like the PyTorch module."""
    C, K = channels, kernel_size
    pw_max = C ** (-0.5)
    dw_max = K ** (-0.5)
    ks = jax.random.split(key, 12)
    u = lambda k, shp, lo, hi: jax.random.uniform(k, shp, jnp.float32, lo, hi)

    ada_s = u(ks[0], (1, C), 0.9, 1.1)          # ada_scale (1,1,C) -> (1,C)
    ada_b = u(ks[1], (1, C), -0.1, 0.1)         # ada_bias

    w1 = u(ks[2], (2 * C, C), -pw_max, pw_max)  # pointwise_conv1.weight (2C,C,1)
    b1 = u(ks[3], (2 * C,), -pw_max, pw_max)
    w1a, w1g = w1[:C].T, w1[C:].T               # (C,C) each (transposed for x@W)
    b1a, b1g = b1[:C].reshape(1, C), b1[C:].reshape(1, C)

    wd = u(ks[4], (C, K), -dw_max, dw_max).T    # depthwise (C,1,K) -> (K,C)
    bd = u(ks[5], (1, C), -dw_max, dw_max)

    gamma = u(ks[6], (1, C), 0.8, 1.2)          # BatchNorm1d affine + running stats
    beta = u(ks[7], (1, C), -0.1, 0.1)
    mean = u(ks[8], (1, C), -0.1, 0.1)
    var = u(ks[9], (1, C), 0.5, 1.5)

    w2 = u(ks[10], (C, C), -pw_max, pw_max).T   # pointwise_conv2.weight (C,C,1)
    b2 = u(ks[11], (1, C), -pw_max, pw_max)

    return (ada_s, ada_b, w1a, b1a, w1g, b1g, wd, bd,
            gamma, beta, mean, var, w2, b2)


def reference_forward(x, params, kernel_size):
    """Pure-JAX f32 reference replicating the PyTorch forward (default path)."""
    (ada_s, ada_b, w1a, b1a, w1g, b1g, wd, bd,
     gamma, beta, mean, var, w2, b2) = params
    B, T, C = x.shape
    K = kernel_size
    P = (K - 1) // 2

    xs = ada_s * x + ada_b
    a = jnp.einsum('btc,cd->btd', xs, w1a) + b1a
    g = jnp.einsum('btc,cd->btd', xs, w1g) + b1g
    y = a * jax.nn.sigmoid(g)
    yp = jnp.pad(y, ((0, 0), (P, P), (0, 0)))
    acc = jnp.zeros((B, T, C), jnp.float32) + bd
    for k in range(K):
        acc = acc + yp[:, k:k + T, :] * wd[k]
    z = (acc - mean) * jax.lax.rsqrt(var + BN_EPS) * gamma + beta
    z = jnp.maximum(z, 0.0)
    return jnp.einsum('btc,cd->btd', z, w2) + b2


if __name__ == "__main__":
    B, T, C, K = 2, 64, 128, 15
    TT = 32                                  # exercise 2 time tiles + halo exchange
    key = jax.random.PRNGKey(0)
    kx, kp = jax.random.split(key)
    x = jax.random.normal(kx, (B, T, C), jnp.float32)
    params = init_params(kp, C, K)

    out, new_cache = convolution_module_forward(x, params, K, time_tile=TT)
    out = jax.block_until_ready(out)

    ref = reference_forward(x, params, K)
    assert out.shape == (B, T, C)
    assert new_cache.shape == (0, 0, 0)
    max_err = float(jnp.max(jnp.abs(out - ref)))
    assert max_err < 5e-2, f"max abs error too large: {max_err}"
    print("KERNEL_OK")
</pallas_src>

<mosaic_0001>
module attributes {stable_mosaic.version = 11 : i64} {
  func.func @conv_module_kernel(%arg0: i32, %arg1: i32, %arg2: memref<1x32x128xf32, #tpu.memory_space<vmem>>, %arg3: memref<1x8x128xf32, #tpu.memory_space<vmem>>, %arg4: memref<1x8x128xf32, #tpu.memory_space<vmem>>, %arg5: memref<128x256xbf16, #tpu.memory_space<vmem>>, %arg6: memref<1x256xf32, #tpu.memory_space<vmem>>, %arg7: memref<15x128xf32, #tpu.memory_space<vmem>>, %arg8: memref<1x128xf32, #tpu.memory_space<vmem>>, %arg9: memref<128x128xbf16, #tpu.memory_space<vmem>>, %arg10: memref<1x128xf32, #tpu.memory_space<vmem>>, %arg11: memref<1x32x128xf32, #tpu.memory_space<vmem>>, %arg12: memref<48x128xf32, #tpu.memory_space<vmem>>, %arg13: memref<48x128xf32, #tpu.memory_space<vmem>>) attributes {dimension_semantics = [#tpu.dimension_semantics<parallel>, #tpu.dimension_semantics<parallel>], iteration_bounds = array<i64: 2, 2>, scalar_prefetch = 0 : i64, scratch_operands = 2 : i64, tpu.core_type = #tpu.core_type<tc>, window_params = [{transform_indices = @transform_0, window_bounds = array<i64: 1, 32, 128>}, {transform_indices = @transform_1, window_bounds = array<i64: 1, 8, 128>}, {transform_indices = @transform_2, window_bounds = array<i64: 1, 8, 128>}, {pipeline_mode = #tpu.pipeline_mode<synchronous>, transform_indices = @transform_3, window_bounds = array<i64: 128, 256>}, {pipeline_mode = #tpu.pipeline_mode<synchronous>, transform_indices = @transform_4, window_bounds = array<i64: 1, 256>}, {pipeline_mode = #tpu.pipeline_mode<synchronous>, transform_indices = @transform_5, window_bounds = array<i64: 15, 128>}, {pipeline_mode = #tpu.pipeline_mode<synchronous>, transform_indices = @transform_6, window_bounds = array<i64: 1, 128>}, {pipeline_mode = #tpu.pipeline_mode<synchronous>, transform_indices = @transform_7, window_bounds = array<i64: 128, 128>}, {pipeline_mode = #tpu.pipeline_mode<synchronous>, transform_indices = @transform_8, window_bounds = array<i64: 1, 128>}, {transform_indices = @transform_9, window_bounds = array<i64: 1, 32, 128>}]} {
    %c0 = arith.constant 0 : index
    %c0_0 = arith.constant 0 : index
    %c0_1 = arith.constant 0 : index
    %0 = vector.load %arg3[%c0, %c0_0, %c0_1] : memref<1x8x128xf32, #tpu.memory_space<vmem>>, vector<1x8x128xf32>
    %1 = vector.shape_cast %0 : vector<1x8x128xf32> to vector<8x128xf32>
    %c0_2 = arith.constant 0 : index
    %c0_3 = arith.constant 0 : index
    %2 = vector.load %arg12[%c0_2, %c0_3] : memref<48x128xf32, #tpu.memory_space<vmem>>, vector<8x128xf32>
    tpu.vector_store %arg12[%c0_2, %c0_3], %1 {strides = array<i32>} : memref<48x128xf32, #tpu.memory_space<vmem>>, vector<8x128xf32>,
    %c0_4 = arith.constant 0 : index
    %c0_5 = arith.constant 0 : index
    %c0_6 = arith.constant 0 : index
    %3 = vector.load %arg2[%c0_4, %c0_5, %c0_6] : memref<1x32x128xf32, #tpu.memory_space<vmem>>, vector<1x32x128xf32>
    %4 = vector.shape_cast %3 : vector<1x32x128xf32> to vector<32x128xf32>
    %c8 = arith.constant 8 : index
    %c0_7 = arith.constant 0 : index
    %5 = vector.load %arg12[%c8, %c0_7] : memref<48x128xf32, #tpu.memory_space<vmem>>, vector<32x128xf32>
    tpu.vector_store %arg12[%c8, %c0_7], %4 {strides = array<i32>} : memref<48x128xf32, #tpu.memory_space<vmem>>, vector<32x128xf32>,
    %c0_8 = arith.constant 0 : index
    %c0_9 = arith.constant 0 : index
    %c0_10 = arith.constant 0 : index
    %6 = vector.load %arg4[%c0_8, %c0_9, %c0_10] : memref<1x8x128xf32, #tpu.memory_space<vmem>>, vector<1x8x128xf32>
    %7 = vector.shape_cast %6 : vector<1x8x128xf32> to vector<8x128xf32>
    %c40 = arith.constant 40 : index
    %c0_11 = arith.constant 0 : index
    %8 = vector.load %arg12[%c40, %c0_11] : memref<48x128xf32, #tpu.memory_space<vmem>>, vector<8x128xf32>
    tpu.vector_store %arg12[%c40, %c0_11], %7 {strides = array<i32>} : memref<48x128xf32, #tpu.memory_space<vmem>>, vector<8x128xf32>,
    %c0_12 = arith.constant 0 : index
    %c0_13 = arith.constant 0 : index
    %9 = vector.load %arg12[%c0_12, %c0_13] : memref<48x128xf32, #tpu.memory_space<vmem>>, vector<48x128xf32>
    %10 = arith.truncf %9 : vector<48x128xf32> to vector<48x128xbf16>
    %c0_14 = arith.constant 0 : index
    %c0_15 = arith.constant 0 : index
    %11 = vector.load %arg5[%c0_14, %c0_15] : memref<128x256xbf16, #tpu.memory_space<vmem>>, vector<128x256xbf16>
    %cst = arith.constant dense<0.000000e+00> : vector<48x256xf32>
    %12 = tpu.matmul %10, %11, %cst {dimension_numbers = #tpu.dot_dimension_numbers<[1], [0], [0], [1], [0, 0, 1, 1], [], []>} : vector<48x128xbf16>, vector<128x256xbf16>, vector<48x256xf32> -> vector<48x256xf32>
    %c0_16 = arith.constant 0 : index
    %c0_17 = arith.constant 0 : index
    %13 = vector.load %arg6[%c0_16, %c0_17] : memref<1x256xf32, #tpu.memory_space<vmem>>, vector<1x256xf32>
    %14 = vector.broadcast %13 : vector<1x256xf32> to vector<48x256xf32>
    %15 = arith.addf %12, %14 : vector<48x256xf32>
    %16 = vector.extract_strided_slice %15 {offsets = [0, 0], sizes = [48, 128], strides = [1, 1]} : vector<48x256xf32> to vector<48x128xf32>
    %17 = vector.extract_strided_slice %15 {offsets = [0, 128], sizes = [48, 128], strides = [1, 1]} : vector<48x256xf32> to vector<48x128xf32>
    %18 = arith.negf %17 : vector<48x128xf32>
    %19 = math.exp %18 : vector<48x128xf32>
    %cst_18 = arith.constant 1.000000e+00 : f32
    %20 = vector.broadcast %cst_18 : f32 to vector<48x128xf32>
    %21 = arith.addf %20, %19 : vector<48x128xf32>
    %22 = arith.divf %20, %21 : vector<48x128xf32>
    %23 = arith.mulf %16, %22 : vector<48x128xf32>
    %c0_19 = arith.constant 0 : index
    %c0_20 = arith.constant 0 : index
    %24 = vector.load %arg13[%c0_19, %c0_20] : memref<48x128xf32, #tpu.memory_space<vmem>>, vector<48x128xf32>
    tpu.vector_store %arg13[%c0_19, %c0_20], %23 {strides = array<i32>} : memref<48x128xf32, #tpu.memory_space<vmem>>, vector<48x128xf32>,
    %c0_i32 = arith.constant 0 : i32
    %25 = arith.cmpi eq, %arg1, %c0_i32 : i32
    %26 = arith.extui %25 : i1 to i32
    %c0_i32_21 = arith.constant 0 : i32
    %27 = arith.cmpi ne, %26, %c0_i32_21 : i32
    scf.if %27 {
      %cst_53 = arith.constant 0.000000e+00 : f32
      %122 = vector.broadcast %cst_53 : f32 to vector<8x128xf32>
      %c0_54 = arith.constant 0 : index
      %c0_55 = arith.constant 0 : index
      %123 = vector.load %arg13[%c0_54, %c0_55] : memref<48x128xf32, #tpu.memory_space<vmem>>, vector<8x128xf32>
      tpu.vector_store %arg13[%c0_54, %c0_55], %122 {strides = array<i32>} : memref<48x128xf32, #tpu.memory_space<vmem>>, vector<8x128xf32>,
    } else {
    }
    %c1_i32 = arith.constant 1 : i32
    %28 = arith.cmpi eq, %arg1, %c1_i32 : i32
    %29 = arith.extui %28 : i1 to i32
    %c0_i32_22 = arith.constant 0 : i32
    %30 = arith.cmpi ne, %29, %c0_i32_22 : i32
    scf.if %30 {
      %cst_53 = arith.constant 0.000000e+00 : f32
      %122 = vector.broadcast %cst_53 : f32 to vector<8x128xf32>
      %c40_54 = arith.constant 40 : index
      %c0_55 = arith.constant 0 : index
      %123 = vector.load %arg13[%c40_54, %c0_55] : memref<48x128xf32, #tpu.memory_space<vmem>>, vector<8x128xf32>
      tpu.vector_store %arg13[%c40_54, %c0_55], %122 {strides = array<i32>} : memref<48x128xf32, #tpu.memory_space<vmem>>, vector<8x128xf32>,
    } else {
    }
    %c0_23 = arith.constant 0 : index
    %c0_24 = arith.constant 0 : index
    %31 = vector.load %arg7[%c0_23, %c0_24] : memref<15x128xf32, #tpu.memory_space<vmem>>, vector<15x128xf32>
    %cst_25 = arith.constant 0.000000e+00 : f32
    %32 = vector.broadcast %cst_25 : f32 to vector<32x128xf32>
    %c0_26 = arith.constant 0 : index
    %c0_27 = arith.constant 0 : index
    %33 = vector.load %arg8[%c0_26, %c0_27] : memref<1x128xf32, #tpu.memory_space<vmem>>, vector<1x128xf32>
    %34 = vector.broadcast %33 : vector<1x128xf32> to vector<32x128xf32>
    %35 = arith.addf %32, %34 : vector<32x128xf32>
    %c1 = arith.constant 1 : index
    %c0_28 = arith.constant 0 : index
    %36 = vector.load %arg13[%c1, %c0_28] : memref<48x128xf32, #tpu.memory_space<vmem>>, vector<32x128xf32>
    %37 = vector.extract_strided_slice %31 {offsets = [0, 0], sizes = [1, 128], strides = [1, 1]} : vector<15x128xf32> to vector<1x128xf32>
    %38 = vector.broadcast %37 : vector<1x128xf32> to vector<32x128xf32>
    %39 = arith.mulf %36, %38 : vector<32x128xf32>
    %40 = arith.addf %35, %39 : vector<32x128xf32>
    %c2 = arith.constant 2 : index
    %c0_29 = arith.constant 0 : index
    %41 = vector.load %arg13[%c2, %c0_29] : memref<48x128xf32, #tpu.memory_space<vmem>>, vector<32x128xf32>
    %42 = vector.extract_strided_slice %31 {offsets = [1, 0], sizes = [1, 128], strides = [1, 1]} : vector<15x128xf32> to vector<1x128xf32>
    %43 = vector.broadcast %42 : vector<1x128xf32> to vector<32x128xf32>
    %44 = arith.mulf %41, %43 : vector<32x128xf32>
    %45 = arith.addf %40, %44 : vector<32x128xf32>
    %c3 = arith.constant 3 : index
    %c0_30 = arith.constant 0 : index
    %46 = vector.load %arg13[%c3, %c0_30] : memref<48x128xf32, #tpu.memory_space<vmem>>, vector<32x128xf32>
    %47 = vector.extract_strided_slice %31 {offsets = [2, 0], sizes = [1, 128], strides = [1, 1]} : vector<15x128xf32> to vector<1x128xf32>
    %48 = vector.broadcast %47 : vector<1x128xf32> to vector<32x128xf32>
    %49 = arith.mulf %46, %48 : vector<32x128xf32>
    %50 = arith.addf %45, %49 : vector<32x128xf32>
    %c4 = arith.constant 4 : index
    %c0_31 = arith.constant 0 : index
    %51 = vector.load %arg13[%c4, %c0_31] : memref<48x128xf32, #tpu.memory_space<vmem>>, vector<32x128xf32>
    %52 = vector.extract_strided_slice %31 {offsets = [3, 0], sizes = [1, 128], strides = [1, 1]} : vector<15x128xf32> to vector<1x128xf32>
    %53 = vector.broadcast %52 : vector<1x128xf32> to vector<32x128xf32>
    %54 = arith.mulf %51, %53 : vector<32x128xf32>
    %55 = arith.addf %50, %54 : vector<32x128xf32>
    %c5 = arith.constant 5 : index
    %c0_32 = arith.constant 0 : index
    %56 = vector.load %arg13[%c5, %c0_32] : memref<48x128xf32, #tpu.memory_space<vmem>>, vector<32x128xf32>
    %57 = vector.extract_strided_slice %31 {offsets = [4, 0], sizes = [1, 128], strides = [1, 1]} : vector<15x128xf32> to vector<1x128xf32>
    %58 = vector.broadcast %57 : vector<1x128xf32> to vector<32x128xf32>
    %59 = arith.mulf %56, %58 : vector<32x128xf32>
    %60 = arith.addf %55, %59 : vector<32x128xf32>
    %c6 = arith.constant 6 : index
    %c0_33 = arith.constant 0 : index
    %61 = vector.load %arg13[%c6, %c0_33] : memref<48x128xf32, #tpu.memory_space<vmem>>, vector<32x128xf32>
    %62 = vector.extract_strided_slice %31 {offsets = [5, 0], sizes = [1, 128], strides = [1, 1]} : vector<15x128xf32> to vector<1x128xf32>
    %63 = vector.broadcast %62 : vector<1x128xf32> to vector<32x128xf32>
    %64 = arith.mulf %61, %63 : vector<32x128xf32>
    %65 = arith.addf %60, %64 : vector<32x128xf32>
    %c7 = arith.constant 7 : index
    %c0_34 = arith.constant 0 : index
    %66 = vector.load %arg13[%c7, %c0_34] : memref<48x128xf32, #tpu.memory_space<vmem>>, vector<32x128xf32>
    %67 = vector.extract_strided_slice %31 {offsets = [6, 0], sizes = [1, 128], strides = [1, 1]} : vector<15x128xf32> to vector<1x128xf32>
    %68 = vector.broadcast %67 : vector<1x128xf32> to vector<32x128xf32>
    %69 = arith.mulf %66, %68 : vector<32x128xf32>
    %70 = arith.addf %65, %69 : vector<32x128xf32>
    %c8_35 = arith.constant 8 : index
    %c0_36 = arith.constant 0 : index
    %71 = vector.load %arg13[%c8_35, %c0_36] : memref<48x128xf32, #tpu.memory_space<vmem>>, vector<32x128xf32>
    %72 = vector.extract_strided_slice %31 {offsets = [7, 0], sizes = [1, 128], strides = [1, 1]} : vector<15x128xf32> to vector<1x128xf32>
    %73 = vector.broadcast %72 : vector<1x128xf32> to vector<32x128xf32>
    %74 = arith.mulf %71, %73 : vector<32x128xf32>
    %75 = arith.addf %70, %74 : vector<32x128xf32>
    %c9 = arith.constant 9 : index
    %c0_37 = arith.constant 0 : index
    %76 = vector.load %arg13[%c9, %c0_37] : memref<48x128xf32, #tpu.memory_space<vmem>>, vector<32x128xf32>
    %77 = vector.extract_strided_slice %31 {offsets = [8, 0], sizes = [1, 128], strides = [1, 1]} : vector<15x128xf32> to vector<1x128xf32>
    %78 = vector.broadcast %77 : vector<1x128xf32> to vector<32x128xf32>
    %79 = arith.mulf %76, %78 : vector<32x128xf32>
    %80 = arith.addf %75, %79 : vector<32x128xf32>
    %c10 = arith.constant 10 : index
    %c0_38 = arith.constant 0 : index
    %81 = vector.load %arg13[%c10, %c0_38] : memref<48x128xf32, #tpu.memory_space<vmem>>, vector<32x128xf32>
    %82 = vector.extract_strided_slice %31 {offsets = [9, 0], sizes = [1, 128], strides = [1, 1]} : vector<15x128xf32> to vector<1x128xf32>
    %83 = vector.broadcast %82 : vector<1x128xf32> to vector<32x128xf32>
    %84 = arith.mulf %81, %83 : vector<32x128xf32>
    %85 = arith.addf %80, %84 : vector<32x128xf32>
    %c11 = arith.constant 11 : index
    %c0_39 = arith.constant 0 : index
    %86 = vector.load %arg13[%c11, %c0_39] : memref<48x128xf32, #tpu.memory_space<vmem>>, vector<32x128xf32>
    %87 = vector.extract_strided_slice %31 {offsets = [10, 0], sizes = [1, 128], strides = [1, 1]} : vector<15x128xf32> to vector<1x128xf32>
    %88 = vector.broadcast %87 : vector<1x128xf32> to vector<32x128xf32>
    %89 = arith.mulf %86, %88 : vector<32x128xf32>
    %90 = arith.addf %85, %89 : vector<32x128xf32>
    %c12 = arith.constant 12 : index
    %c0_40 = arith.constant 0 : index
    %91 = vector.load %arg13[%c12, %c0_40] : memref<48x128xf32, #tpu.memory_space<vmem>>, vector<32x128xf32>
    %92 = vector.extract_strided_slice %31 {offsets = [11, 0], sizes = [1, 128], strides = [1, 1]} : vector<15x128xf32> to vector<1x128xf32>
    %93 = vector.broadcast %92 : vector<1x128xf32> to vector<32x128xf32>
    %94 = arith.mulf %91, %93 : vector<32x128xf32>
    %95 = arith.addf %90, %94 : vector<32x128xf32>
    %c13 = arith.constant 13 : index
    %c0_41 = arith.constant 0 : index
    %96 = vector.load %arg13[%c13, %c0_41] : memref<48x128xf32, #tpu.memory_space<vmem>>, vector<32x128xf32>
    %97 = vector.extract_strided_slice %31 {offsets = [12, 0], sizes = [1, 128], strides = [1, 1]} : vector<15x128xf32> to vector<1x128xf32>
    %98 = vector.broadcast %97 : vector<1x128xf32> to vector<32x128xf32>
    %99 = arith.mulf %96, %98 : vector<32x128xf32>
    %100 = arith.addf %95, %99 : vector<32x128xf32>
    %c14 = arith.constant 14 : index
    %c0_42 = arith.constant 0 : index
    %101 = vector.load %arg13[%c14, %c0_42] : memref<48x128xf32, #tpu.memory_space<vmem>>, vector<32x128xf32>
    %102 = vector.extract_strided_slice %31 {offsets = [13, 0], sizes = [1, 128], strides = [1, 1]} : vector<15x128xf32> to vector<1x128xf32>
    %103 = vector.broadcast %102 : vector<1x128xf32> to vector<32x128xf32>
    %104 = arith.mulf %101, %103 : vector<32x128xf32>
    %105 = arith.addf %100, %104 : vector<32x128xf32>
    %c15 = arith.constant 15 : index
    %c0_43 = arith.constant 0 : index
    %106 = vector.load %arg13[%c15, %c0_43] : memref<48x128xf32, #tpu.memory_space<vmem>>, vector<32x128xf32>
    %107 = vector.extract_strided_slice %31 {offsets = [14, 0], sizes = [1, 128], strides = [1, 1]} : vector<15x128xf32> to vector<1x128xf32>
    %108 = vector.broadcast %107 : vector<1x128xf32> to vector<32x128xf32>
    %109 = arith.mulf %106, %108 : vector<32x128xf32>
    %110 = arith.addf %105, %109 : vector<32x128xf32>
    %cst_44 = arith.constant 0.000000e+00 : f32
    %111 = vector.broadcast %cst_44 : f32 to vector<32x128xf32>
    %112 = arith.maximumf %110, %111 : vector<32x128xf32>
    %113 = arith.truncf %112 : vector<32x128xf32> to vector<32x128xbf16>
    %c0_45 = arith.constant 0 : index
    %c0_46 = arith.constant 0 : index
    %114 = vector.load %arg9[%c0_45, %c0_46] : memref<128x128xbf16, #tpu.memory_space<vmem>>, vector<128x128xbf16>
    %cst_47 = arith.constant dense<0.000000e+00> : vector<32x128xf32>
    %115 = tpu.matmul %113, %114, %cst_47 {dimension_numbers = #tpu.dot_dimension_numbers<[1], [0], [0], [1], [0, 0, 1, 1], [], []>} : vector<32x128xbf16>, vector<128x128xbf16>, vector<32x128xf32> -> vector<32x128xf32>
    %c0_48 = arith.constant 0 : index
    %c0_49 = arith.constant 0 : index
    %116 = vector.load %arg10[%c0_48, %c0_49] : memref<1x128xf32, #tpu.memory_space<vmem>>, vector<1x128xf32>
    %117 = vector.broadcast %116 : vector<1x128xf32> to vector<32x128xf32>
    %118 = arith.addf %115, %117 : vector<32x128xf32>
    %c0_50 = arith.constant 0 : index
    %c0_51 = arith.constant 0 : index
    %c0_52 = arith.constant 0 : index
    %119 = vector.load %arg11[%c0_50, %c0_51, %c0_52] : memref<1x32x128xf32, #tpu.memory_space<vmem>>, vector<1x32x128xf32>
    %120 = vector.shape_cast %119 : vector<1x32x128xf32> to vector<32x128xf32>
    %121 = vector.shape_cast %118 : vector<32x128xf32> to vector<1x32x128xf32>
    tpu.vector_store %arg11[%c0_50, %c0_51, %c0_52], %121 {strides = array<i32>} : memref<1x32x128xf32, #tpu.memory_space<vmem>>, vector<1x32x128xf32>,
    return
  }
  func.func @transform_0(%arg0: i32, %arg1: i32) -> (i32, i32, i32) {
    %c0_i32 = arith.constant 0 : i32
    %c0_i32_0 = arith.constant 0 : i32
    return %arg0, %arg1, %c0_i32 : i32, i32, i32
  }
  func.func @transform_1(%arg0: i32, %arg1: i32) -> (i32, i32, i32) {
    %c4_i32 = arith.constant 4 : i32
    %0 = arith.muli %arg1, %c4_i32 : i32
    %c1_i32 = arith.constant 1 : i32
    %1 = arith.subi %0, %c1_i32 : i32
    %c0_i32 = arith.constant 0 : i32
    %2 = arith.maxsi %1, %c0_i32 : i32
    %c0_i32_0 = arith.constant 0 : i32
    %c0_i32_1 = arith.constant 0 : i32
    return %arg0, %2, %c0_i32_0 : i32, i32, i32
  }
  func.func @transform_2(%arg0: i32, %arg1: i32) -> (i32, i32, i32) {
    %c1_i32 = arith.constant 1 : i32
    %0 = arith.addi %arg1, %c1_i32 : i32
    %c4_i32 = arith.constant 4 : i32
    %1 = arith.muli %0, %c4_i32 : i32
    %c7_i32 = arith.constant 7 : i32
    %2 = arith.minsi %1, %c7_i32 : i32
    %c0_i32 = arith.constant 0 : i32
    %c0_i32_0 = arith.constant 0 : i32
    return %arg0, %2, %c0_i32 : i32, i32, i32
  }
  func.func @transform_3(%arg0: i32, %arg1: i32) -> (i32, i32) {
    %c0_i32 = arith.constant 0 : i32
    %c0_i32_0 = arith.constant 0 : i32
    %c0_i32_1 = arith.constant 0 : i32
    return %c0_i32, %c0_i32_0 : i32, i32
  }
  func.func @transform_4(%arg0: i32, %arg1: i32) -> (i32, i32) {
    %c0_i32 = arith.constant 0 : i32
    %c0_i32_0 = arith.constant 0 : i32
    %c0_i32_1 = arith.constant 0 : i32
    return %c0_i32, %c0_i32_0 : i32, i32
  }
  func.func @transform_5(%arg0: i32, %arg1: i32) -> (i32, i32) {
    %c0_i32 = arith.constant 0 : i32
    %c0_i32_0 = arith.constant 0 : i32
    %c0_i32_1 = arith.constant 0 : i32
    return %c0_i32, %c0_i32_0 : i32, i32
  }
  func.func @transform_6(%arg0: i32, %arg1: i32) -> (i32, i32) {
    %c0_i32 = arith.constant 0 : i32
    %c0_i32_0 = arith.constant 0 : i32
    %c0_i32_1 = arith.constant 0 : i32
    return %c0_i32, %c0_i32_0 : i32, i32
  }
  func.func @transform_7(%arg0: i32, %arg1: i32) -> (i32, i32) {
    %c0_i32 = arith.constant 0 : i32
    %c0_i32_0 = arith.constant 0 : i32
    %c0_i32_1 = arith.constant 0 : i32
    return %c0_i32, %c0_i32_0 : i32, i32
  }
  func.func @transform_8(%arg0: i32, %arg1: i32) -> (i32, i32) {
    %c0_i32 = arith.constant 0 : i32
    %c0_i32_0 = arith.constant 0 : i32
    %c0_i32_1 = arith.constant 0 : i32
    return %c0_i32, %c0_i32_0 : i32, i32
  }
  func.func @transform_9(%arg0: i32, %arg1: i32) -> (i32, i32, i32) {
    %c0_i32 = arith.constant 0 : i32
    %c0_i32_0 = arith.constant 0 : i32
    return %arg0, %arg1, %c0_i32 : i32, i32, i32
  }
}

</mosaic_0001>

<llo_original>
// kernel: tpu_custom_call.1
$region0: #{tpu_custom_call.1}
  #allocation0 [shape = 'u32[]', space=smem, size = 0x4, offset = 0x4, fixed_abs, tag = 'smem constant byte address 0x4 - core index']
  #allocation1 [shape = 'u32[72,128]{1,0:T(1,128)}', space=vmem, size = 0x9000, scoped, tag = 'internal scratch']
  #allocation2 [shape = 'f32[48,128]{1,0:T(8,128)}', space=vmem, size = 0x6000, scoped, tag = 'scratch operand']
  #allocation3 [shape = 'f32[48,128]{1,0:T(8,128)}', space=vmem, size = 0x6000, scoped, tag = 'scratch operand']
  %s0 = inlined_call_operand.hbm [shape: f32[2,64,128], index: 0, kind: input, shape index: {}]
  %s1 = inlined_call_operand.hbm [shape: f32[2,64,128], index: 1, kind: input, shape index: {}]
  %s2 = inlined_call_operand.hbm [shape: f32[2,64,128], index: 2, kind: input, shape index: {}]
  %s3 = inlined_call_operand.hbm [shape: bf16[128,256], index: 3, kind: input, shape index: {}]
  %s4 = inlined_call_operand.vmem [shape: f32[1,256], index: 4, kind: input, shape index: {}]
  %s5 = inlined_call_operand.hbm [shape: f32[15,128], index: 5, kind: input, shape index: {}]
  %s6 = inlined_call_operand.vmem [shape: f32[1,128], index: 6, kind: input, shape index: {}]
  %s7 = inlined_call_operand.hbm [shape: bf16[128,128], index: 7, kind: input, shape index: {}]
  %s8 = inlined_call_operand.vmem [shape: f32[1,128], index: 8, kind: input, shape index: {}]
  %s9 = inlined_call_operand.hbm [shape: f32[2,64,128], index: 9, kind: output, shape index: {}]
  %s10 = sld [smem:[#allocation0]]
  $region101: #{tpu_custom_call.1} parent=0
    _
  %s12 = ssub.s32 1, %s10
  %s13 = scalar_select 0, %s12, %s10
  $region1: #{tpu_custom_call.1} parent=0
    #allocation4 [shape = 'u8[32768]{0}', space=vmem, size = 0x8000, scoped, tag = 'input window, operand 0']
    #allocation5 [shape = 's32[2]{0}', space=sflag, size = 0x8, scoped, tag = 'scoped memory for tpu_custom_call.1']
    #allocation6 [shape = 's32[2]{0}', space=sflag, size = 0x8, scoped, tag = 'scoped memory for tpu_custom_call.1']
    #allocation7 [shape = 'u8[8192]{0}', space=vmem, size = 0x2000, scoped, tag = 'input window, operand 1']
    #allocation8 [shape = 's32[2]{0}', space=sflag, size = 0x8, scoped, tag = 'scoped memory for tpu_custom_call.1']
    #allocation9 [shape = 'u8[8192]{0}', space=vmem, size = 0x2000, scoped, tag = 'input window, operand 2']
    #allocation10 [shape = 'u8[65536]{0}', space=vmem, size = 0x10000, scoped, tag = 'input window, operand 3, single buffered']
    #allocation11 [shape = 's32[1]{0}', space=sflag, size = 0x4, scoped, tag = 'scoped memory for tpu_custom_call.1']
    #allocation12 [shape = 'u8[8192]{0}', space=vmem, size = 0x2000, scoped, tag = 'input window, operand 5, single buffered']
    #allocation13 [shape = 'u8[32768]{0}', space=vmem, size = 0x8000, scoped, tag = 'input window, operand 7, single buffered']
    #allocation14 [shape = 's32[1]{0}', space=sflag, size = 0x4, scoped, tag = 'scoped memory for tpu_custom_call.1']
    #allocation15 [shape = 'u8[32768]{0}', space=vmem, size = 0x8000, scoped, tag = 'output window, operand 0']
    %14 = vsyncpa [#allocation5], 0
    %s15 = scalar_lea.sflag [#allocation5], 1
    %16 = vsyncpa %s15, 0
    %17 = vsyncpa [#allocation8], 0
    %s18 = scalar_lea.sflag [#allocation8], 1
    %19 = vsyncpa %s18, 0
    %20 = vsyncpa [#allocation11], 0
    %21 = vsyncpa [#allocation14], 0
    %22 = vsyncpa [#allocation6], 0
    %s23 = scalar_lea.sflag [#allocation6], 1
    %24 = vsyncpa %s23, 0
    loop: start=0, step=1, limit=6
    $region2: #{tpu_custom_call.1} parent=1 // loop_pre_header
      _
    $region3: #{tpu_custom_call.1} parent=1 // loop_header
      %s26 = sphi 0, %s30
      %p27 = scmp.ge.s32.totalorder %s26, 6
      %s33 = sphi 0, %s45
      %s34 = sphi 0, %s41
      %s35 = sphi 0, %s33
      %s36 = sphi 0, %s34
      %s37 = sphi 0, %s35
      %s38 = sphi 0, %s36
      %s50 = sphi 0, %s52
      %s53 = sphi 0, %s50
      %s54 = sphi 0, %s53
      %s70 = sphi 0, %s54
      %s86 = sphi 0, %s88
      %s89 = sphi 0, %s86
      %s90 = sphi 0, %s89
      %s106 = sphi 0, %s90
      %s122 = sphi 0, %s124
      %s125 = sphi 0, %s122
      %s126 = sphi 0, %s125
      %s142 = sphi 0, %s126
      %s146 = sphi 0, %s146
      %s148 = sphi 0, %s146
      %s149 = sphi 0, %s148
      %s163 = sphi 0, %s149
      %s167 = sphi 0, %s167
      %s169 = sphi 0, %s167
      %s170 = sphi 0, %s169
      %s184 = sphi 0, %s170
      %s188 = sphi 0, %s188
      %s190 = sphi 0, %s188
      %s191 = sphi 0, %s190
      %s205 = sphi 0, %s191
      %s209 = sphi 0, %s209
      %s211 = sphi 0, %s209
      %s212 = sphi 0, %s211
      %s226 = sphi 0, %s212
      %s230 = sphi 0, %s230
      %s232 = sphi 0, %s230
      %s233 = sphi 0, %s232
      %s247 = sphi 0, %s233
      %s251 = sphi 0, %s251
      %s253 = sphi 0, %s251
      %s254 = sphi 0, %s253
      %s268 = sphi 0, %s254
      %s276 = sphi 0, %s278
      %s279 = sphi 0, %s276
      %s280 = sphi 0, %s279
      %s296 = sphi 0, %s280
    $region4: #{tpu_custom_call.1} parent=1 // loop_header_branch
      %29 = sbr.rel (%p27) target = $region8
    $region5: #{tpu_custom_call.1} parent=1 // loop_body
      %s31 = ssub.s32 %s26, 1
      %s32 = ssub.s32 %s26, 2
      %s39 = sadd.s32 1, %s34
      %p40 = scmp.ge.s32.totalorder %s39, 2
      %s41 = scalar_select %p40, 0, %s39
      %s42 = sadd.s32 1, %s33
      %s43 = scalar_select %p40, %s42, %s33
      %p44 = scmp.ge.s32.totalorder %s43, 2
      %s45 = scalar_select %p44, 0, %s43
      %s46 = ssub.s32 %s33, %s45
      %s47 = ssub.s32 %s34, %s41
      %s48 = sor.u32 %s46, %s47
      %p49 = scmp.eq.s32.totalorder %s48, 0
      %s51 = sadd.s32 %s50, 1
      %s52 = scalar_select %p49, %s50, %s51
      %p55 = pneg %p49
      %p56 = scmp.eq.s32.totalorder %s26, 3
      %p57 = por %p55, %p56
      %p58 = scmp.ne.s32.totalorder %s50, %s53
      %p59 = scmp.eq.s32.totalorder %s26, 0
      %p60 = por %p58, %p59
      %p61 = scmp.ne.s32.totalorder %s50, %s53
      %p62 = scmp.eq.s32.totalorder %s31, 3
      %p63 = por %p61, %p62
      %p64 = scmp.ne.s32.totalorder %s53, %s54
      %p65 = scmp.eq.s32.totalorder %s31, 0
      %p66 = por %p64, %p65
      %p67 = scmp.ne.s32.totalorder %s53, %s54
      %p68 = scmp.eq.s32.totalorder %s32, 3
      %p69 = por %p67, %p68
      %p71 = scmp.ne.s32.totalorder %s54, %s70
      %p72 = scmp.eq.s32.totalorder %s32, 0
      %p73 = por %p71, %p72
      %s74 = smul.u32 %s34, 4
      %s75 = ssub.s32 %s74, 1
      %p76 = scmp.gt.s32.totalorder %s75, 0
      %s77 = scalar_select %p76, %s75, 0
      %s78 = smul.u32 %s41, 4
      %s79 = ssub.s32 %s78, 1
      %p80 = scmp.gt.s32.totalorder %s79, 0
      %s81 = scalar_select %p80, %s79, 0
      %s82 = ssub.s32 %s33, %s45
      %s83 = ssub.s32 %s77, %s81
      %s84 = sor.u32 %s82, %s83
      %p85 = scmp.eq.s32.totalorder %s84, 0
      %s87 = sadd.s32 %s86, 1
      %s88 = scalar_select %p85, %s86, %s87
      %p91 = pneg %p85
      %p92 = scmp.eq.s32.totalorder %s26, 3
      %p93 = por %p91, %p92
      %p94 = scmp.ne.s32.totalorder %s86, %s89
      %p95 = scmp.eq.s32.totalorder %s26, 0
      %p96 = por %p94, %p95
      %p97 = scmp.ne.s32.totalorder %s86, %s89
      %p98 = scmp.eq.s32.totalorder %s31, 3
      %p99 = por %p97, %p98
      %p100 = scmp.ne.s32.totalorder %s89, %s90
      %p101 = scmp.eq.s32.totalorder %s31, 0
      %p102 = por %p100, %p101
      %p103 = scmp.ne.s32.totalorder %s89, %s90
      %p104 = scmp.eq.s32.totalorder %s32, 3
      %p105 = por %p103, %p104
      %p107 = scmp.ne.s32.totalorder %s90, %s106
      %p108 = scmp.eq.s32.totalorder %s32, 0
      %p109 = por %p107, %p108
      %s110 = sadd.s32 %s34, 1
      %s111 = smul.u32 %s110, 4
      %p112 = scmp.lt.s32.totalorder %s111, 7
      %s113 = scalar_select %p112, %s111, 7
      %s114 = sadd.s32 %s41, 1
      %s115 = smul.u32 %s114, 4
      %p116 = scmp.lt.s32.totalorder %s115, 7
      %s117 = scalar_select %p116, %s115, 7
      %s118 = ssub.s32 %s33, %s45
      %s119 = ssub.s32 %s113, %s117
      %s120 = sor.u32 %s118, %s119
      %p121 = scmp.eq.s32.totalorder %s120, 0
      %s123 = sadd.s32 %s122, 1
      %s124 = scalar_select %p121, %s122, %s123
      %p127 = pneg %p121
      %p128 = scmp.eq.s32.totalorder %s26, 3
      %p129 = por %p127, %p128
      %p130 = scmp.ne.s32.totalorder %s122, %s125
      %p131 = scmp.eq.s32.totalorder %s26, 0
      %p132 = por %p130, %p131
      %p133 = scmp.ne.s32.totalorder %s122, %s125
      %p134 = scmp.eq.s32.totalorder %s31, 3
      %p135 = por %p133, %p134
      %p136 = scmp.ne.s32.totalorder %s125, %s126
      %p137 = scmp.eq.s32.totalorder %s31, 0
      %p138 = por %p136, %p137
      %p139 = scmp.ne.s32.totalorder %s125, %s126
      %p140 = scmp.eq.s32.totalorder %s32, 3
      %p141 = por %p139, %p140
      %p143 = scmp.ne.s32.totalorder %s126, %s142
      %p144 = scmp.eq.s32.totalorder %s32, 0
      %p145 = por %p143, %p144
      %s147 = sadd.s32 %s146, 1
      %p150 = scmp.eq.s32.totalorder %s26, 3
      %p151 = scmp.ne.s32.totalorder %s146, %s148
      %p152 = scmp.eq.s32.totalorder %s26, 0
      %p153 = por %p151, %p152
      %p154 = scmp.ne.s32.totalorder %s146, %s148
      %p155 = scmp.eq.s32.totalorder %s31, 3
      %p156 = por %p154, %p155
      %p157 = scmp.ne.s32.totalorder %s148, %s149
      %p158 = scmp.eq.s32.totalorder %s31, 0
      %p159 = por %p157, %p158
      %p160 = scmp.ne.s32.totalorder %s148, %s149
      %p161 = scmp.eq.s32.totalorder %s32, 3
      %p162 = por %p160, %p161
      %p164 = scmp.ne.s32.totalorder %s149, %s163
      %p165 = scmp.eq.s32.totalorder %s32, 0
      %p166 = por %p164, %p165
      %s168 = sadd.s32 %s167, 1
      %p171 = scmp.eq.s32.totalorder %s26, 3
      %p172 = scmp.ne.s32.totalorder %s167, %s169
      %p173 = scmp.eq.s32.totalorder %s26, 0
      %p174 = por %p172, %p173
      %p175 = scmp.ne.s32.totalorder %s167, %s169
      %p176 = scmp.eq.s32.totalorder %s31, 3
      %p177 = por %p175, %p176
      %p178 = scmp.ne.s32.totalorder %s169, %s170
      %p179 = scmp.eq.s32.totalorder %s31, 0
      %p180 = por %p178, %p179
      %p181 = scmp.ne.s32.totalorder %s169, %s170
      %p182 = scmp.eq.s32.totalorder %s32, 3
      %p183 = por %p181, %p182
      %p185 = scmp.ne.s32.totalorder %s170, %s184
      %p186 = scmp.eq.s32.totalorder %s32, 0
      %p187 = por %p185, %p186
      %s189 = sadd.s32 %s188, 1
      %p192 = scmp.eq.s32.totalorder %s26, 3
      %p193 = scmp.ne.s32.totalorder %s188, %s190
      %p194 = scmp.eq.s32.totalorder %s26, 0
      %p195 = por %p193, %p194
      %p196 = scmp.ne.s32.totalorder %s188, %s190
      %p197 = scmp.eq.s32.totalorder %s31, 3
      %p198 = por %p196, %p197
      %p199 = scmp.ne.s32.totalorder %s190, %s191
      %p200 = scmp.eq.s32.totalorder %s31, 0
      %p201 = por %p199, %p200
      %p202 = scmp.ne.s32.totalorder %s190, %s191
      %p203 = scmp.eq.s32.totalorder %s32, 3
      %p204 = por %p202, %p203
      %p206 = scmp.ne.s32.totalorder %s191, %s205
      %p207 = scmp.eq.s32.totalorder %s32, 0
      %p208 = por %p206, %p207
      %s210 = sadd.s32 %s209, 1
      %p213 = scmp.eq.s32.totalorder %s26, 3
      %p214 = scmp.ne.s32.totalorder %s209, %s211
      %p215 = scmp.eq.s32.totalorder %s26, 0
      %p216 = por %p214, %p215
      %p217 = scmp.ne.s32.totalorder %s209, %s211
      %p218 = scmp.eq.s32.totalorder %s31, 3
      %p219 = por %p217, %p218
      %p220 = scmp.ne.s32.totalorder %s211, %s212
      %p221 = scmp.eq.s32.totalorder %s31, 0
      %p222 = por %p220, %p221
      %p223 = scmp.ne.s32.totalorder %s211, %s212
      %p224 = scmp.eq.s32.totalorder %s32, 3
      %p225 = por %p223, %p224
      %p227 = scmp.ne.s32.totalorder %s212, %s226
      %p228 = scmp.eq.s32.totalorder %s32, 0
      %p229 = por %p227, %p228
      %s231 = sadd.s32 %s230, 1
      %p234 = scmp.eq.s32.totalorder %s26, 3
      %p235 = scmp.ne.s32.totalorder %s230, %s232
      %p236 = scmp.eq.s32.totalorder %s26, 0
      %p237 = por %p235, %p236
      %p238 = scmp.ne.s32.totalorder %s230, %s232
      %p239 = scmp.eq.s32.totalorder %s31, 3
      %p240 = por %p238, %p239
      %p241 = scmp.ne.s32.totalorder %s232, %s233
      %p242 = scmp.eq.s32.totalorder %s31, 0
      %p243 = por %p241, %p242
      %p244 = scmp.ne.s32.totalorder %s232, %s233
      %p245 = scmp.eq.s32.totalorder %s32, 3
      %p246 = por %p244, %p245
      %p248 = scmp.ne.s32.totalorder %s233, %s247
      %p249 = scmp.eq.s32.totalorder %s32, 0
      %p250 = por %p248, %p249
      %s252 = sadd.s32 %s251, 1
      %p255 = scmp.eq.s32.totalorder %s26, 3
      %p256 = scmp.ne.s32.totalorder %s251, %s253
      %p257 = scmp.eq.s32.totalorder %s26, 0
      %p258 = por %p256, %p257
      %p259 = scmp.ne.s32.totalorder %s251, %s253
      %p260 = scmp.eq.s32.totalorder %s31, 3
      %p261 = por %p259, %p260
      %p262 = scmp.ne.s32.totalorder %s253, %s254
      %p263 = scmp.eq.s32.totalorder %s31, 0
      %p264 = por %p262, %p263
      %p265 = scmp.ne.s32.totalorder %s253, %s254
      %p266 = scmp.eq.s32.totalorder %s32, 3
      %p267 = por %p265, %p266
      %p269 = scmp.ne.s32.totalorder %s254, %s268
      %p270 = scmp.eq.s32.totalorder %s32, 0
      %p271 = por %p269, %p270
      %s272 = ssub.s32 %s33, %s45
      %s273 = ssub.s32 %s34, %s41
      %s274 = sor.u32 %s272, %s273
      %p275 = scmp.eq.s32.totalorder %s274, 0
      %s277 = sadd.s32 %s276, 1
      %s278 = scalar_select %p275, %s276, %s277
      %p281 = pneg %p275
      %p282 = scmp.eq.s32.totalorder %s26, 3
      %p283 = por %p281, %p282
      %p284 = scmp.ne.s32.totalorder %s276, %s279
      %p285 = scmp.eq.s32.totalorder %s26, 0
      %p286 = por %p284, %p285
      %p287 = scmp.ne.s32.totalorder %s276, %s279
      %p288 = scmp.eq.s32.totalorder %s31, 3
      %p289 = por %p287, %p288
      %p290 = scmp.ne.s32.totalorder %s279, %s280
      %p291 = scmp.eq.s32.totalorder %s31, 0
      %p292 = por %p290, %p291
      %p293 = scmp.ne.s32.totalorder %s279, %s280
      %p294 = scmp.eq.s32.totalorder %s32, 3
      %p295 = por %p293, %p294
      %p297 = scmp.ne.s32.totalorder %s280, %s296
      %p298 = scmp.eq.s32.totalorder %s32, 0
      %p299 = por %p297, %p298
      %p300 = scmp.le.s32.totalorder 1, %s26
      %p301 = scmp.lt.s32.totalorder %s26, 5
      %p302 = pnand %p300, %p301
      %p303 = pneg %p302
      // Predicated region
      $region9: #{tpu_custom_call.1} parent=5 // pred_check
        _
      $region10: #{tpu_custom_call.1} parent=5 // pred_check_branch
        %305 = sbr.rel (%p302) target = $region12
      $region11: #{tpu_custom_call.1} parent=5 // pred_region
        %s306 = ssub.s32 %s26, 1
        // Predicated region
        $region13: #{tpu_custom_call.1} parent=11 // pred_check
          %p307 = pneg %p159
        $region14: #{tpu_custom_call.1} parent=11 // pred_check_branch
          %309 = sbr.rel (%p307) target = $region16
        $region15: #{tpu_custom_call.1} parent=11 // pred_region
          %311 = vsyncadd [#allocation11], 0
          %s312 = sshll.u32 %s3, 4
          %s313 = int_to_ptr.hbm [resolvable:$true] %s312
          %s314 = sshll.u32 [#allocation10], 4
          %s315 = int_to_ptr.vmem [resolvable:$true] %s314
          %320 = dma.hbm_to_vmem [thread:$0]  %s313, 2048, %s315, [#allocation11], 128, 128, 8
        $region16: #{tpu_custom_call.1} parent=11 // pred_fallthru
          _
        // Predicated region
        $region17: #{tpu_custom_call.1} parent=11 // pred_check
          %p321 = pneg %p180
        $region18: #{tpu_custom_call.1} parent=11 // pred_check_branch
          %323 = sbr.rel (%p321) target = $region20
        $region19: #{tpu_custom_call.1} parent=11 // pred_region
          _
        $region20: #{tpu_custom_call.1} parent=11 // pred_fallthru
          _
        // Predicated region
        $region21: #{tpu_custom_call.1} parent=11 // pred_check
          %p324 = pneg %p201
        $region22: #{tpu_custom_call.1} parent=11 // pred_check_branch
          %326 = sbr.rel (%p324) target = $region24
        $region23: #{tpu_custom_call.1} parent=11 // pred_region
          %328 = vsyncadd [#allocation11], 0
          %s329 = sshll.u32 %s5, 4
          %s330 = int_to_ptr.hbm [resolvable:$true] %s329
          %s331 = sshll.u32 [#allocation12], 4
          %s332 = int_to_ptr.vmem [resolvable:$true] %s331
          %337 = dma.hbm_to_vmem [thread:$0]  %s330, 256, %s332, [#allocation11], 128, 128, 8
        $region24: #{tpu_custom_call.1} parent=11 // pred_fallthru
          _
        // Predicated region
        $region25: #{tpu_custom_call.1} parent=11 // pred_check
          %p338 = pneg %p222
        $region26: #{tpu_custom_call.1} parent=11 // pred_check_branch
          %340 = sbr.rel (%p338) target = $region28
        $region27: #{tpu_custom_call.1} parent=11 // pred_region
          _
        $region28: #{tpu_custom_call.1} parent=11 // pred_fallthru
          _
        // Predicated region
        $region29: #{tpu_custom_call.1} parent=11 // pred_check
          %p341 = pneg %p243
        $region30: #{tpu_custom_call.1} parent=11 // pred_check_branch
          %343 = sbr.rel (%p341) target = $region32
        $region31: #{tpu_custom_call.1} parent=11 // pred_region
          %345 = vsyncadd [#allocation14], 0
          %s346 = sshll.u32 %s7, 4
          %s347 = int_to_ptr.hbm [resolvable:$true] %s346
          %s348 = sshll.u32 [#allocation13], 4
          %s349 = int_to_ptr.vmem [resolvable:$true] %s348
          %354 = dma.hbm_to_vmem [thread:$0]  %s347, 1024, %s349, [#allocation14], 64, 64, 4
        $region32: #{tpu_custom_call.1} parent=11 // pred_fallthru
          _
        // Predicated region
        $region33: #{tpu_custom_call.1} parent=11 // pred_check
          %p355 = pneg %p264
        $region34: #{tpu_custom_call.1} parent=11 // pred_check_branch
          %357 = sbr.rel (%p355) target = $region36
        $region35: #{tpu_custom_call.1} parent=11 // pred_region
          _
        $region36: #{tpu_custom_call.1} parent=11 // pred_fallthru
          _
      $region12: #{tpu_custom_call.1} parent=5 // pred_fallthru
        _
      %p358 = scmp.lt.s32.totalorder %s26, 4
      // Predicated region
      $region37: #{tpu_custom_call.1} parent=5 // pred_check
        %p359 = pneg %p358
      $region38: #{tpu_custom_call.1} parent=5 // pred_check_branch
        %361 = sbr.rel (%p359) target = $region40
      $region39: #{tpu_custom_call.1} parent=5 // pred_region
        // Predicated region
        $region41: #{tpu_custom_call.1} parent=39 // pred_check
          %p362 = pneg %p60
        $region42: #{tpu_custom_call.1} parent=39 // pred_check_branch
          %364 = sbr.rel (%p362) target = $region44
        $region43: #{tpu_custom_call.1} parent=39 // pred_region
          %s365 = sand.u32 %s50, 1
          %s366 = scalar_lea.sflag [#allocation5], %s365
          %s367 = sand.u32 %s50, 1
          %s368 = smul.addr %s367, 32
          %s369 = scalar_lea.vmem [#allocation4], %s368
          %s370 = smul.u32 4, %s34
          %372 = vsyncadd %s366, 0
          %s373 = smul.addr %s33, 8
          %s374 = sadd.s32 %s370, %s373
          %s375 = smul.addr %s374, 8
          %s376 = scalar_lea.hbm %s0, %s375
          %s377 = sshll.u32 %s376, 4
          %s378 = int_to_ptr.hbm [resolvable:$true] %s377
          %s379 = sshll.u32 %s369, 4
          %s380 = int_to_ptr.vmem [resolvable:$true] %s379
          %385 = dma.hbm_to_vmem [thread:$0]  %s378, 512, %s380, %s366, 128, 128, 8
        $region44: #{tpu_custom_call.1} parent=39 // pred_fallthru
          _
        // Predicated region
        $region45: #{tpu_custom_call.1} parent=39 // pred_check
          %p386 = pneg %p96
        $region46: #{tpu_custom_call.1} parent=39 // pred_check_branch
          %388 = sbr.rel (%p386) target = $region48
        $region47: #{tpu_custom_call.1} parent=39 // pred_region
          %s389 = sand.u32 %s26, 1
          %s390 = scalar_lea.sflag [#allocation8], %s389
          %s391 = sand.u32 %s86, 1
          %s392 = smul.addr %s391, 8
          %s393 = scalar_lea.vmem [#allocation7], %s392
          %s394 = smul.u32 %s34, 4
          %s395 = ssub.s32 %s394, 1
          %p396 = scmp.gt.s32.totalorder %s395, 0
          %s397 = scalar_select %p396, %s395, 0
          %399 = vsyncadd %s390, 0
          %s400 = smul.addr %s33, 8
          %s401 = sadd.s32 %s397, %s400
          %s402 = smul.addr %s401, 8
          %s403 = scalar_lea.hbm %s1, %s402
          %s405 = sshll.u32 %s403, 4
          %s406 = int_to_ptr.hbm [resolvable:$true] %s405
          %s407 = sshll.u32 %s393, 4
          %s408 = int_to_ptr.vmem [resolvable:$true] %s407
          %410 = dma.hbm_to_vmem [thread:$0]  %s406, 128, %s408, %s390
        $region48: #{tpu_custom_call.1} parent=39 // pred_fallthru
          _
        // Predicated region
        $region49: #{tpu_custom_call.1} parent=39 // pred_check
          %p411 = pneg %p132
        $region50: #{tpu_custom_call.1} parent=39 // pred_check_branch
          %413 = sbr.rel (%p411) target = $region52
        $region51: #{tpu_custom_call.1} parent=39 // pred_region
          %s414 = sand.u32 %s26, 1
          %s415 = scalar_lea.sflag [#allocation8], %s414
          %s416 = sand.u32 %s122, 1
          %s417 = smul.addr %s416, 8
          %s418 = scalar_lea.vmem [#allocation9], %s417
          %s419 = sadd.s32 %s34, 1
          %s420 = smul.u32 %s419, 4
          %p421 = scmp.lt.s32.totalorder %s420, 7
          %s422 = scalar_select %p421, %s420, 7
          %424 = vsyncadd %s415, 0
          %s425 = smul.addr %s33, 8
          %s426 = sadd.s32 %s422, %s425
          %s427 = smul.addr %s426, 8
          %s428 = scalar_lea.hbm %s2, %s427
          %s430 = sshll.u32 %s428, 4
          %s431 = int_to_ptr.hbm [resolvable:$true] %s430
          %s432 = sshll.u32 %s418, 4
          %s433 = int_to_ptr.vmem [resolvable:$true] %s432
          %435 = dma.hbm_to_vmem [thread:$0]  %s431, 128, %s433, %s415
        $region52: #{tpu_custom_call.1} parent=39 // pred_fallthru
          _
      $region40: #{tpu_custom_call.1} parent=5 // pred_fallthru
        _
      %p436 = scmp.le.s32.totalorder 1, %s26
      %p437 = scmp.lt.s32.totalorder %s26, 5
      %p438 = pnand %p436, %p437
      %p439 = pneg %p438
      // Predicated region
      $region53: #{tpu_custom_call.1} parent=5 // pred_check
        _
      $region54: #{tpu_custom_call.1} parent=5 // pred_check_branch
        %441 = sbr.rel (%p438) target = $region56
      $region55: #{tpu_custom_call.1} parent=5 // pred_region
        %s442 = ssub.s32 %s26, 1
        %s443 = sand.u32 %s53, 1
        %s444 = scalar_lea.sflag [#allocation5], %s443
        %s445 = sand.u32 %s53, 1
        %s446 = smul.addr %s445, 32
        %s447 = scalar_lea.vmem [#allocation4], %s446
        // Predicated region
        $region57: #{tpu_custom_call.1} parent=55 // pred_check
          %p448 = pneg %p66
        $region58: #{tpu_custom_call.1} parent=55 // pred_check_branch
          %450 = sbr.rel (%p448) target = $region60
        $region59: #{tpu_custom_call.1} parent=55 // pred_region
          %452 = dma.done %s444, 512
        $region60: #{tpu_custom_call.1} parent=55 // pred_fallthru
          _
        %s453 = sand.u32 %s31, 1
        %s454 = scalar_lea.sflag [#allocation8], %s453
        %s455 = sand.u32 %s89, 1
        %s456 = smul.addr %s455, 8
        %s457 = scalar_lea.vmem [#allocation7], %s456
        // Predicated region
        $region61: #{tpu_custom_call.1} parent=55 // pred_check
          %p458 = pneg %p102
        $region62: #{tpu_custom_call.1} parent=55 // pred_check_branch
          %460 = sbr.rel (%p458) target = $region64
        $region63: #{tpu_custom_call.1} parent=55 // pred_region
          %462 = dma.done %s454, 128
        $region64: #{tpu_custom_call.1} parent=55 // pred_fallthru
          _
        %s463 = sand.u32 %s31, 1
        %s464 = scalar_lea.sflag [#allocation8], %s463
        %s465 = sand.u32 %s125, 1
        %s466 = smul.addr %s465, 8
        %s467 = scalar_lea.vmem [#allocation9], %s466
        // Predicated region
        $region65: #{tpu_custom_call.1} parent=55 // pred_check
          %p468 = pneg %p138
        $region66: #{tpu_custom_call.1} parent=55 // pred_check_branch
          %470 = sbr.rel (%p468) target = $region68
        $region67: #{tpu_custom_call.1} parent=55 // pred_region
          %472 = dma.done %s464, 128
        $region68: #{tpu_custom_call.1} parent=55 // pred_fallthru
          _
        // Predicated region
        $region69: #{tpu_custom_call.1} parent=55 // pred_check
          %p473 = pneg %p159
        $region70: #{tpu_custom_call.1} parent=55 // pred_check_branch
          %475 = sbr.rel (%p473) target = $region72
        $region71: #{tpu_custom_call.1} parent=55 // pred_region
          %477 = dma.done [#allocation11], 2048
        $region72: #{tpu_custom_call.1} parent=55 // pred_fallthru
          _
        // Predicated region
        $region73: #{tpu_custom_call.1} parent=55 // pred_check
          %p478 = pneg %p201
        $region74: #{tpu_custom_call.1} parent=55 // pred_check_branch
          %480 = sbr.rel (%p478) target = $region76
        $region75: #{tpu_custom_call.1} parent=55 // pred_region
          %482 = dma.done [#allocation11], 256
        $region76: #{tpu_custom_call.1} parent=55 // pred_fallthru
          _
        // Predicated region
        $region77: #{tpu_custom_call.1} parent=55 // pred_check
          %p483 = pneg %p243
        $region78: #{tpu_custom_call.1} parent=55 // pred_check_branch
          %485 = sbr.rel (%p483) target = $region80
        $region79: #{tpu_custom_call.1} parent=55 // pred_region
          %487 = dma.done [#allocation14], 1024
        $region80: #{tpu_custom_call.1} parent=55 // pred_fallthru
          _
        %s488 = sand.u32 %s53, 1
        %s489 = scalar_lea.sflag [#allocation5], %s488
        %s490 = sand.u32 %s53, 1
        %s491 = smul.addr %s490, 32
        %s492 = scalar_lea.vmem [#allocation4], %s491
        %p493 = pneg %p66
        %p494 = pneg %p63
        %s495 = sand.u32 %s31, 1
        %s496 = scalar_lea.sflag [#allocation8], %s495
        %s497 = sand.u32 %s89, 1
        %s498 = smul.addr %s497, 8
        %s499 = scalar_lea.vmem [#allocation7], %s498
        %p500 = pneg %p102
        %p501 = pneg %p99
        %s502 = sand.u32 %s31, 1
        %s503 = scalar_lea.sflag [#allocation8], %s502
        %s504 = sand.u32 %s125, 1
        %s505 = smul.addr %s504, 8
        %s506 = scalar_lea.vmem [#allocation9], %s505
        %p507 = pneg %p138
        %p508 = pneg %p135
        %p509 = pneg %p159
        %p510 = pneg %p156
        %p511 = pneg %p180
        %p512 = pneg %p177
        %p513 = pneg %p201
        %p514 = pneg %p198
        %p515 = pneg %p222
        %p516 = pneg %p219
        %p517 = pneg %p243
        %p518 = pneg %p240
        %p519 = pneg %p264
        %p520 = pneg %p261
        %p521 = pneg %p292
        %p522 = pneg %p289
        %s523 = sand.u32 %s279, 1
        %s524 = scalar_lea.sflag [#allocation6], %s523
        %s525 = sand.u32 %s279, 1
        %s526 = smul.addr %s525, 32
        %s527 = scalar_lea.vmem [#allocation15], %s526
        %s528 = smul.u32 4, %s36
        %s529 = smul.u32 %s36, 4
        %s530 = ssub.s32 %s529, 1
        %p531 = scmp.gt.s32.totalorder %s530, 0
        %s532 = scalar_select %p531, %s530, 0
        %s533 = sadd.s32 %s36, 1
        %s534 = smul.u32 %s533, 4
        %p535 = scmp.lt.s32.totalorder %s534, 7
        %s536 = scalar_select %p535, %s534, 7
        %s537 = smul.u32 4, %s36
        %v538 = vld [vmem:[%s457] sm:$0xff]
        %539 = vst [vmem:[#allocation2] sm:$0xff] %v538
        %v540 = vld [vmem:[%s447] sm:$0xff]
        %v541 = vld [vmem:[%s447 + $0x8] sm:$0xff]
        %v542 = vld [vmem:[%s447 + $0x10] sm:$0xff]
        %v543 = vld [vmem:[%s447 + $0x18] sm:$0xff]
        %544 = vst [vmem:[#allocation2 + $0x8] sm:$0xff] %v540
        %545 = vst [vmem:[#allocation2 + $0x10] sm:$0xff] %v541
        %546 = vst [vmem:[#allocation2 + $0x18] sm:$0xff] %v542
        %547 = vst [vmem:[#allocation2 + $0x20] sm:$0xff] %v543
        %v548 = vld [vmem:[%s467] sm:$0xff]
        %549 = vst [vmem:[#allocation2 + $0x28] sm:$0xff] %v548
        %v550 = vld [vmem:[#allocation2] sm:$0xff]
        %v551 = vld [vmem:[#allocation2 + $0x8] sm:$0xff]
        %v552 = vld [vmem:[#allocation2 + $0x10] sm:$0xff]
        %v553 = vld [vmem:[#allocation2 + $0x18] sm:$0xff]
        %v554 = vld [vmem:[#allocation2 + $0x20] sm:$0xff]
        %v555 = vld [vmem:[#allocation2 + $0x28] sm:$0xff]
        %v556 = vpack.c.bf16 %v551, %v550
        %v557 = vpack.c.bf16 %v553, %v552
        %v558 = vpack.c.bf16 %v555, %v554
        %v559 = vld [vmem:[#allocation10] sm:$0xff]
        %v560 = vld [vmem:[#allocation10 + $0x8] sm:$0xff]
        %v561 = vld [vmem:[#allocation10 + $0x10] sm:$0xff]
        %v562 = vld [vmem:[#allocation10 + $0x18] sm:$0xff]
        %v563 = vld [vmem:[#allocation10 + $0x20] sm:$0xff]
        %v564 = vld [vmem:[#allocation10 + $0x28] sm:$0xff]
        %v565 = vld [vmem:[#allocation10 + $0x30] sm:$0xff]
        %v566 = vld [vmem:[#allocation10 + $0x38] sm:$0xff]
        %v567 = vld [vmem:[#allocation10 + $0x40] sm:$0xff]
        %v568 = vld [vmem:[#allocation10 + $0x48] sm:$0xff]
        %v569 = vld [vmem:[#allocation10 + $0x50] sm:$0xff]
        %v570 = vld [vmem:[#allocation10 + $0x58] sm:$0xff]
        %v571 = vld [vmem:[#allocation10 + $0x60] sm:$0xff]
        %v572 = vld [vmem:[#allocation10 + $0x68] sm:$0xff]
        %v573 = vld [vmem:[#allocation10 + $0x70] sm:$0xff]
        %v574 = vld [vmem:[#allocation10 + $0x78] sm:$0xff]
        %v575 = vld [vmem:[%s4] sm:$0x3]
        %v577 = vperm.slane %v575, 0
        %v578 = vperm.slane %v575, 1
        %v597 = vunpack.c.l.b16 %v559
        %v598 = vunpack.c.h.b16 %v559
        %v599 = vunpack.c.l.b16 %v560
        %v600 = vunpack.c.h.b16 %v560
        %v601 = vunpack.c.l.b16 %v561
        %v602 = vunpack.c.h.b16 %v561
        %v603 = vunpack.c.l.b16 %v562
        %v604 = vunpack.c.h.b16 %v562
        %v605 = vunpack.c.l.b16 %v563
        %v606 = vunpack.c.h.b16 %v563
        %v607 = vunpack.c.l.b16 %v564
        %v608 = vunpack.c.h.b16 %v564
        %v609 = vunpack.c.l.b16 %v565
        %v610 = vunpack.c.h.b16 %v565
        %v611 = vunpack.c.l.b16 %v566
        %v612 = vunpack.c.h.b16 %v566
        %v613 = vunpack.c.l.b16 %v567
        %v614 = vunpack.c.h.b16 %v567
        %v615 = vunpack.c.l.b16 %v568
        %v616 = vunpack.c.h.b16 %v568
        %v617 = vunpack.c.l.b16 %v569
        %v618 = vunpack.c.h.b16 %v569
        %v619 = vunpack.c.l.b16 %v570
        %v620 = vunpack.c.h.b16 %v570
        %v621 = vunpack.c.l.b16 %v571
        %v622 = vunpack.c.h.b16 %v571
        %v623 = vunpack.c.l.b16 %v572
        %v624 = vunpack.c.h.b16 %v572
        %v625 = vunpack.c.l.b16 %v573
        %v626 = vunpack.c.h.b16 %v573
        %v627 = vunpack.c.l.b16 %v574
        %v628 = vunpack.c.h.b16 %v574
        %v629 = vpack.c.b16 %v599, %v597
        %v630 = vpack.c.b16 %v600, %v598
        %v631 = vpack.c.b16 %v603, %v601
        %v632 = vpack.c.b16 %v604, %v602
        %v633 = vpack.c.b16 %v607, %v605
        %v634 = vpack.c.b16 %v608, %v606
        %v635 = vpack.c.b16 %v611, %v609
        %v636 = vpack.c.b16 %v612, %v610
        %v637 = vpack.c.b16 %v615, %v613
        %v638 = vpack.c.b16 %v616, %v614
        %v639 = vpack.c.b16 %v619, %v617
        %v640 = vpack.c.b16 %v620, %v618
        %v641 = vpack.c.b16 %v623, %v621
        %v642 = vpack.c.b16 %v624, %v622
        %v643 = vpack.c.b16 %v627, %v625
        %v644 = vpack.c.b16 %v628, %v626
        %661 = vmatpush.bf16.msra.mxu0 %v643
        %662 = vmatpush.bf16.msra.mxu0 %v641
        %663 = vmatpush.bf16.msra.mxu0 %v639
        %664 = vmatpush.bf16.msra.mxu0 %v637
        %665 = vmatpush.bf16.msra.mxu0 %v635
        %666 = vmatpush.bf16.msra.mxu0 %v633
        %667 = vmatpush.bf16.msra.mxu0 %v631
        %668 = vmatpush.bf16.msra.mxu0 %v629
        %669 = vmatmul.bf16.gmra.mxu0 %v556
        %v670 = vpop.f32.mrf.mxu0
        %v671 = vadd.f32 %v577, %v670
        %v672 = vpop.f32.mrf.mxu0
        %v673 = vadd.f32 %v577, %v672
        %674 = vmatmul.bf16.gmra.mxu0 %v557
        %v675 = vpop.f32.mrf.mxu0
        %v676 = vadd.f32 %v577, %v675
        %v677 = vpop.f32.mrf.mxu0
        %v678 = vadd.f32 %v577, %v677
        %679 = vmatmul.bf16.gmra.mxu0 %v558
        %v680 = vpop.f32.mrf.mxu0
        %v681 = vadd.f32 %v577, %v680
        %v682 = vpop.f32.mrf.mxu0
        %v683 = vadd.f32 %v577, %v682
        %684 = vdwg.mxu0
        %685 = vmatpush.bf16.msra.mxu0 %v644
        %686 = vmatpush.bf16.msra.mxu0 %v642
        %687 = vmatpush.bf16.msra.mxu0 %v640
        %688 = vmatpush.bf16.msra.mxu0 %v638
        %689 = vmatpush.bf16.msra.mxu0 %v636
        %690 = vmatpush.bf16.msra.mxu0 %v634
        %691 = vmatpush.bf16.msra.mxu0 %v632
        %692 = vmatpush.bf16.msra.mxu0 %v630
        %693 = vmatmul.bf16.gmra.mxu0 %v556
        %v694 = vpop.f32.mrf.mxu0
        %v695 = vadd.f32 %v578, %v694
        %v696 = vpop.f32.mrf.mxu0
        %v697 = vadd.f32 %v578, %v696
        %698 = vmatmul.bf16.gmra.mxu0 %v557
        %v699 = vpop.f32.mrf.mxu0
        %v700 = vadd.f32 %v578, %v699
        %v701 = vpop.f32.mrf.mxu0
        %v702 = vadd.f32 %v578, %v701
        %703 = vmatmul.bf16.gmra.mxu0 %v558
        %v704 = vpop.f32.mrf.mxu0
        %v705 = vadd.f32 %v578, %v704
        %v706 = vpop.f32.mrf.mxu0
        %v707 = vadd.f32 %v578, %v706
        %708 = vdwg.mxu0
        %v709 = vxor.u32 %v695, 2147483648
        %v710 = vxor.u32 %v697, 2147483648
        %v711 = vxor.u32 %v700, 2147483648
        %v712 = vxor.u32 %v702, 2147483648
        %v713 = vxor.u32 %v705, 2147483648
        %v714 = vxor.u32 %v707, 2147483648
        %v715 = vmul.f32 %v709, 1.442695
        %v716 = vpow.pop %v715
        %v717 = vmul.f32 %v710, 1.442695
        %v718 = vpow.pop %v717
        %v719 = vmul.f32 %v711, 1.442695
        %v720 = vpow.pop %v719
        %v721 = vmul.f32 %v712, 1.442695
        %v722 = vpow.pop %v721
        %v723 = vmul.f32 %v713, 1.442695
        %v724 = vpow.pop %v723
        %v725 = vmul.f32 %v714, 1.442695
        %v726 = vpow.pop %v725
        %v727 = vadd.f32 %v716, 1.0
        %v728 = vadd.f32 %v718, 1.0
        %v729 = vadd.f32 %v720, 1.0
        %v730 = vadd.f32 %v722, 1.0
        %v731 = vadd.f32 %v724, 1.0
        %v732 = vadd.f32 %v726, 1.0
        %v733 = vrcp.pop %v727
        %v734 = vmul.f32 %v727, %v733
        %v735 = vsub.f32 1.0, %v734
        %v736 = vmul.f32 %v733, %v735
        %v737 = vadd.f32 %v733, %v736
        %vm738 = vweird.f32 %v727
        %vm739 = vweird.f32 %v733
        %vm740 = vmor %vm738, %vm739
        %v741 = vsel %vm740, %v733, %v737
        %v742 = vand.u32 2147483647, %v727
        %vm743 = vcmp.eq.f32.partialorder %v742, 8.507059e+37
        %v744 = vand.u32 %v727, 2147483648
        %v745 = vor.u32 1.1754944e-38, %v744
        %v746 = vsel %vm743, %v745, %v741
        %v747 = vmul.f32 1.0, %v746
        %v748 = vrcp.pop %v728
        %v749 = vmul.f32 %v728, %v748
        %v750 = vsub.f32 1.0, %v749
        %v751 = vmul.f32 %v748, %v750
        %v752 = vadd.f32 %v748, %v751
        %vm753 = vweird.f32 %v728
        %vm754 = vweird.f32 %v748
        %vm755 = vmor %vm753, %vm754
        %v756 = vsel %vm755, %v748, %v752
        %v757 = vand.u32 2147483647, %v728
        %vm758 = vcmp.eq.f32.partialorder %v757, 8.507059e+37
        %v759 = vand.u32 %v728, 2147483648
        %v760 = vor.u32 1.1754944e-38, %v759
        %v761 = vsel %vm758, %v760, %v756
        %v762 = vmul.f32 1.0, %v761
        %v763 = vrcp.pop %v729
        %v764 = vmul.f32 %v729, %v763
        %v765 = vsub.f32 1.0, %v764
        %v766 = vmul.f32 %v763, %v765
        %v767 = vadd.f32 %v763, %v766
        %vm768 = vweird.f32 %v729
        %vm769 = vweird.f32 %v763
        %vm770 = vmor %vm768, %vm769
        %v771 = vsel %vm770, %v763, %v767
        %v772 = vand.u32 2147483647, %v729
        %vm773 = vcmp.eq.f32.partialorder %v772, 8.507059e+37
        %v774 = vand.u32 %v729, 2147483648
        %v775 = vor.u32 1.1754944e-38, %v774
        %v776 = vsel %vm773, %v775, %v771
        %v777 = vmul.f32 1.0, %v776
        %v778 = vrcp.pop %v730
        %v779 = vmul.f32 %v730, %v778
        %v780 = vsub.f32 1.0, %v779
        %v781 = vmul.f32 %v778, %v780
        %v782 = vadd.f32 %v778, %v781
        %vm783 = vweird.f32 %v730
        %vm784 = vweird.f32 %v778
        %vm785 = vmor %vm783, %vm784
        %v786 = vsel %vm785, %v778, %v782
        %v787 = vand.u32 2147483647, %v730
        %vm788 = vcmp.eq.f32.partialorder %v787, 8.507059e+37
        %v789 = vand.u32 %v730, 2147483648
        %v790 = vor.u32 1.1754944e-38, %v789
        %v791 = vsel %vm788, %v790, %v786
        %v792 = vmul.f32 1.0, %v791
        %v793 = vrcp.pop %v731
        %v794 = vmul.f32 %v731, %v793
        %v795 = vsub.f32 1.0, %v794
        %v796 = vmul.f32 %v793, %v795
        %v797 = vadd.f32 %v793, %v796
        %vm798 = vweird.f32 %v731
        %vm799 = vweird.f32 %v793
        %vm800 = vmor %vm798, %vm799
        %v801 = vsel %vm800, %v793, %v797
        %v802 = vand.u32 2147483647, %v731
        %vm803 = vcmp.eq.f32.partialorder %v802, 8.507059e+37
        %v804 = vand.u32 %v731, 2147483648
        %v805 = vor.u32 1.1754944e-38, %v804
        %v806 = vsel %vm803, %v805, %v801
        %v807 = vmul.f32 1.0, %v806
        %v808 = vrcp.pop %v732
        %v809 = vmul.f32 %v732, %v808
        %v810 = vsub.f32 1.0, %v809
        %v811 = vmul.f32 %v808, %v810
        %v812 = vadd.f32 %v808, %v811
        %vm813 = vweird.f32 %v732
        %vm814 = vweird.f32 %v808
        %vm815 = vmor %vm813, %vm814
        %v816 = vsel %vm815, %v808, %v812
        %v817 = vand.u32 2147483647, %v732
        %vm818 = vcmp.eq.f32.partialorder %v817, 8.507059e+37
        %v819 = vand.u32 %v732, 2147483648
        %v820 = vor.u32 1.1754944e-38, %v819
        %v821 = vsel %vm818, %v820, %v816
        %v822 = vmul.f32 1.0, %v821
        %v823 = vmul.f32 %v671, %v747
        %v824 = vmul.f32 %v673, %v762
        %v825 = vmul.f32 %v676, %v777
        %v826 = vmul.f32 %v678, %v792
        %v827 = vmul.f32 %v681, %v807
        %v828 = vmul.f32 %v683, %v822
        %829 = vst [vmem:[#allocation3] sm:$0xff] %v823
        %830 = vst [vmem:[#allocation3 + $0x8] sm:$0xff] %v824
        %831 = vst [vmem:[#allocation3 + $0x10] sm:$0xff] %v825
        %832 = vst [vmem:[#allocation3 + $0x18] sm:$0xff] %v826
        %833 = vst [vmem:[#allocation3 + $0x20] sm:$0xff] %v827
        %834 = vst [vmem:[#allocation3 + $0x28] sm:$0xff] %v828
        %p835 = scmp.eq.s32.totalorder %s36, 0
        // Predicated region
        $region81: #{tpu_custom_call.1} parent=55 // pred_check
          %p836 = pneg %p835
        $region82: #{tpu_custom_call.1} parent=55 // pred_check_branch
          %838 = sbr.rel (%p836) target = $region84
        $region83: #{tpu_custom_call.1} parent=55 // pred_region
          %839 = vst [vmem:[#allocation3] sm:$0xff] 0.0
        $region84: #{tpu_custom_call.1} parent=55 // pred_fallthru
          _
        %p840 = scmp.eq.s32.totalorder %s36, 1
        // Predicated region
        $region85: #{tpu_custom_call.1} parent=55 // pred_check
          %p841 = pneg %p840
        $region86: #{tpu_custom_call.1} parent=55 // pred_check_branch
          %843 = sbr.rel (%p841) target = $region88
        $region87: #{tpu_custom_call.1} parent=55 // pred_region
          %844 = vst [vmem:[#allocation3 + $0x28] sm:$0xff] 0.0
        $region88: #{tpu_custom_call.1} parent=55 // pred_fallthru
          _
        %v845 = vld [vmem:[#allocation12] sm:$0xff]
        %v846 = vld [vmem:[#allocation12 + $0x8] sm:$0x7f]
        %v847 = vld [vmem:[%s6] sm:$0x1]
        %v849 = vperm.slane %v847, 0
        %v851 = vadd.f32 %v849, 0.0
        %v852 = vld [vmem:[#allocation3 + $0x1] sm:$0xff]
        %v853 = vld [vmem:[#allocation3 + $0x9] sm:$0xff]
        %v854 = vld [vmem:[#allocation3 + $0x11] sm:$0xff]
        %v855 = vld [vmem:[#allocation3 + $0x19] sm:$0xff]
        %v856 = vperm.slane %v845, 0
        %v857 = vmul.f32 %v852, %v856
        %v858 = vmul.f32 %v853, %v856
        %v859 = vmul.f32 %v854, %v856
        %v860 = vmul.f32 %v855, %v856
        %v861 = vadd.f32 %v851, %v857
        %v862 = vadd.f32 %v851, %v858
        %v863 = vadd.f32 %v851, %v859
        %v864 = vadd.f32 %v851, %v860
        %v865 = vld [vmem:[#allocation3 + $0x2] sm:$0xff]
        %v866 = vld [vmem:[#allocation3 + $0xa] sm:$0xff]
        %v867 = vld [vmem:[#allocation3 + $0x12] sm:$0xff]
        %v868 = vld [vmem:[#allocation3 + $0x1a] sm:$0xff]
        %v869 = vperm.slane %v845, 1
        %v870 = vmul.f32 %v865, %v869
        %v871 = vmul.f32 %v866, %v869
        %v872 = vmul.f32 %v867, %v869
        %v873 = vmul.f32 %v868, %v869
        %v874 = vadd.f32 %v861, %v870
        %v875 = vadd.f32 %v862, %v871
        %v876 = vadd.f32 %v863, %v872
        %v877 = vadd.f32 %v864, %v873
        %v878 = vld [vmem:[#allocation3 + $0x3] sm:$0xff]
        %v879 = vld [vmem:[#allocation3 + $0xb] sm:$0xff]
        %v880 = vld [vmem:[#allocation3 + $0x13] sm:$0xff]
        %v881 = vld [vmem:[#allocation3 + $0x1b] sm:$0xff]
        %v882 = vperm.slane %v845, 2
        %v883 = vmul.f32 %v878, %v882
        %v884 = vmul.f32 %v879, %v882
        %v885 = vmul.f32 %v880, %v882
        %v886 = vmul.f32 %v881, %v882
        %v887 = vadd.f32 %v874, %v883
        %v888 = vadd.f32 %v875, %v884
        %v889 = vadd.f32 %v876, %v885
        %v890 = vadd.f32 %v877, %v886
        %v891 = vld [vmem:[#allocation3 + $0x4] sm:$0xff]
        %v892 = vld [vmem:[#allocation3 + $0xc] sm:$0xff]
        %v893 = vld [vmem:[#allocation3 + $0x14] sm:$0xff]
        %v894 = vld [vmem:[#allocation3 + $0x1c] sm:$0xff]
        %v895 = vperm.slane %v845, 3
        %v896 = vmul.f32 %v891, %v895
        %v897 = vmul.f32 %v892, %v895
        %v898 = vmul.f32 %v893, %v895
        %v899 = vmul.f32 %v894, %v895
        %v900 = vadd.f32 %v887, %v896
        %v901 = vadd.f32 %v888, %v897
        %v902 = vadd.f32 %v889, %v898
        %v903 = vadd.f32 %v890, %v899
        %v904 = vld [vmem:[#allocation3 + $0x5] sm:$0xff]
        %v905 = vld [vmem:[#allocation3 + $0xd] sm:$0xff]
        %v906 = vld [vmem:[#allocation3 + $0x15] sm:$0xff]
        %v907 = vld [vmem:[#allocation3 + $0x1d] sm:$0xff]
        %v908 = vperm.slane %v845, 4
        %v909 = vmul.f32 %v904, %v908
        %v910 = vmul.f32 %v905, %v908
        %v911 = vmul.f32 %v906, %v908
        %v912 = vmul.f32 %v907, %v908
        %v913 = vadd.f32 %v900, %v909
        %v914 = vadd.f32 %v901, %v910
        %v915 = vadd.f32 %v902, %v911
        %v916 = vadd.f32 %v903, %v912
        %v917 = vld [vmem:[#allocation3 + $0x6] sm:$0xff]
        %v918 = vld [vmem:[#allocation3 + $0xe] sm:$0xff]
        %v919 = vld [vmem:[#allocation3 + $0x16] sm:$0xff]
        %v920 = vld [vmem:[#allocation3 + $0x1e] sm:$0xff]
        %v921 = vperm.slane %v845, 5
        %v922 = vmul.f32 %v917, %v921
        %v923 = vmul.f32 %v918, %v921
        %v924 = vmul.f32 %v919, %v921
        %v925 = vmul.f32 %v920, %v921
        %v926 = vadd.f32 %v913, %v922
        %v927 = vadd.f32 %v914, %v923
        %v928 = vadd.f32 %v915, %v924
        %v929 = vadd.f32 %v916, %v925
        %v930 = vld [vmem:[#allocation3 + $0x7] sm:$0xff]
        %v931 = vld [vmem:[#allocation3 + $0xf] sm:$0xff]
        %v932 = vld [vmem:[#allocation3 + $0x17] sm:$0xff]
        %v933 = vld [vmem:[#allocation3 + $0x1f] sm:$0xff]
        %v934 = vperm.slane %v845, 6
        %v935 = vmul.f32 %v930, %v934
        %v936 = vmul.f32 %v931, %v934
        %v937 = vmul.f32 %v932, %v934
        %v938 = vmul.f32 %v933, %v934
        %v939 = vadd.f32 %v926, %v935
        %v940 = vadd.f32 %v927, %v936
        %v941 = vadd.f32 %v928, %v937
        %v942 = vadd.f32 %v929, %v938
        %v943 = vld [vmem:[#allocation3 + $0x8] sm:$0xff]
        %v944 = vld [vmem:[#allocation3 + $0x10] sm:$0xff]
        %v945 = vld [vmem:[#allocation3 + $0x18] sm:$0xff]
        %v946 = vld [vmem:[#allocation3 + $0x20] sm:$0xff]
        %v947 = vperm.slane %v845, 7
        %v948 = vmul.f32 %v943, %v947
        %v949 = vmul.f32 %v944, %v947
        %v950 = vmul.f32 %v945, %v947
        %v951 = vmul.f32 %v946, %v947
        %v952 = vadd.f32 %v939, %v948
        %v953 = vadd.f32 %v940, %v949
        %v954 = vadd.f32 %v941, %v950
        %v955 = vadd.f32 %v942, %v951
        %v956 = vld [vmem:[#allocation3 + $0x21] sm:$0xff]
        %v957 = vperm.slane %v846, 0
        %v958 = vmul.f32 %v853, %v957
        %v959 = vmul.f32 %v854, %v957
        %v960 = vmul.f32 %v855, %v957
        %v961 = vmul.f32 %v956, %v957
        %v962 = vadd.f32 %v952, %v958
        %v963 = vadd.f32 %v953, %v959
        %v964 = vadd.f32 %v954, %v960
        %v965 = vadd.f32 %v955, %v961
        %v966 = vld [vmem:[#allocation3 + $0x22] sm:$0xff]
        %v967 = vperm.slane %v846, 1
        %v968 = vmul.f32 %v866, %v967
        %v969 = vmul.f32 %v867, %v967
        %v970 = vmul.f32 %v868, %v967
        %v971 = vmul.f32 %v966, %v967
        %v972 = vadd.f32 %v962, %v968
        %v973 = vadd.f32 %v963, %v969
        %v974 = vadd.f32 %v964, %v970
        %v975 = vadd.f32 %v965, %v971
        %v976 = vld [vmem:[#allocation3 + $0x23] sm:$0xff]
        %v977 = vperm.slane %v846, 2
        %v978 = vmul.f32 %v879, %v977
        %v979 = vmul.f32 %v880, %v977
        %v980 = vmul.f32 %v881, %v977
        %v981 = vmul.f32 %v976, %v977
        %v982 = vadd.f32 %v972, %v978
        %v983 = vadd.f32 %v973, %v979
        %v984 = vadd.f32 %v974, %v980
        %v985 = vadd.f32 %v975, %v981
        %v986 = vld [vmem:[#allocation3 + $0x24] sm:$0xff]
        %v987 = vperm.slane %v846, 3
        %v988 = vmul.f32 %v892, %v987
        %v989 = vmul.f32 %v893, %v987
        %v990 = vmul.f32 %v894, %v987
        %v991 = vmul.f32 %v986, %v987
        %v992 = vadd.f32 %v982, %v988
        %v993 = vadd.f32 %v983, %v989
        %v994 = vadd.f32 %v984, %v990
        %v995 = vadd.f32 %v985, %v991
        %v996 = vld [vmem:[#allocation3 + $0x25] sm:$0xff]
        %v997 = vperm.slane %v846, 4
        %v998 = vmul.f32 %v905, %v997
        %v999 = vmul.f32 %v906, %v997
        %v1000 = vmul.f32 %v907, %v997
        %v1001 = vmul.f32 %v996, %v997
        %v1002 = vadd.f32 %v992, %v998
        %v1003 = vadd.f32 %v993, %v999
        %v1004 = vadd.f32 %v994, %v1000
        %v1005 = vadd.f32 %v995, %v1001
        %v1006 = vld [vmem:[#allocation3 + $0x26] sm:$0xff]
        %v1007 = vperm.slane %v846, 5
        %v1008 = vmul.f32 %v918, %v1007
        %v1009 = vmul.f32 %v919, %v1007
        %v1010 = vmul.f32 %v920, %v1007
        %v1011 = vmul.f32 %v1006, %v1007
        %v1012 = vadd.f32 %v1002, %v1008
        %v1013 = vadd.f32 %v1003, %v1009
        %v1014 = vadd.f32 %v1004, %v1010
        %v1015 = vadd.f32 %v1005, %v1011
        %v1016 = vld [vmem:[#allocation3 + $0x27] sm:$0xff]
        %v1017 = vperm.slane %v846, 6
        %v1018 = vmul.f32 %v931, %v1017
        %v1019 = vmul.f32 %v932, %v1017
        %v1020 = vmul.f32 %v933, %v1017
        %v1021 = vmul.f32 %v1016, %v1017
        %v1022 = vadd.f32 %v1012, %v1018
        %v1023 = vadd.f32 %v1013, %v1019
        %v1024 = vadd.f32 %v1014, %v1020
        %v1025 = vadd.f32 %v1015, %v1021
        %v1026 = vmax.f32 %v1022, 0.0
        %v1027 = vmax.f32 %v1023, 0.0
        %v1028 = vmax.f32 %v1024, 0.0
        %v1029 = vmax.f32 %v1025, 0.0
        %v1030 = vpack.c.bf16 %v1027, %v1026
        %v1031 = vpack.c.bf16 %v1029, %v1028
        %v1032 = vld [vmem:[#allocation13] sm:$0xf]
        %v1033 = vld [vmem:[#allocation13 + $0x4] sm:$0xf]
        %v1034 = vld [vmem:[#allocation13 + $0x8] sm:$0xf]
        %v1035 = vld [vmem:[#allocation13 + $0xc] sm:$0xf]
        %v1036 = vld [vmem:[#allocation13 + $0x10] sm:$0xf]
        %v1037 = vld [vmem:[#allocation13 + $0x14] sm:$0xf]
        %v1038 = vld [vmem:[#allocation13 + $0x18] sm:$0xf]
        %v1039 = vld [vmem:[#allocation13 + $0x1c] sm:$0xf]
        %v1040 = vld [vmem:[#allocation13 + $0x20] sm:$0xf]
        %v1041 = vld [vmem:[#allocation13 + $0x24] sm:$0xf]
        %v1042 = vld [vmem:[#allocation13 + $0x28] sm:$0xf]
        %v1043 = vld [vmem:[#allocation13 + $0x2c] sm:$0xf]
        %v1044 = vld [vmem:[#allocation13 + $0x30] sm:$0xf]
        %v1045 = vld [vmem:[#allocation13 + $0x34] sm:$0xf]
        %v1046 = vld [vmem:[#allocation13 + $0x38] sm:$0xf]
        %v1047 = vld [vmem:[#allocation13 + $0x3c] sm:$0xf]
        %v1048 = vld [vmem:[%s8] sm:$0x1]
        %v1050 = vperm.slane %v1048, 0
        %v1068 = vunpack.c.l.b16 %v1032
        %v1069 = vunpack.c.l.b16 %v1033
        %v1070 = vunpack.c.l.b16 %v1034
        %v1071 = vunpack.c.l.b16 %v1035
        %v1072 = vunpack.c.l.b16 %v1036
        %v1073 = vunpack.c.l.b16 %v1037
        %v1074 = vunpack.c.l.b16 %v1038
        %v1075 = vunpack.c.l.b16 %v1039
        %v1076 = vunpack.c.l.b16 %v1040
        %v1077 = vunpack.c.l.b16 %v1041
        %v1078 = vunpack.c.l.b16 %v1042
        %v1079 = vunpack.c.l.b16 %v1043
        %v1080 = vunpack.c.l.b16 %v1044
        %v1081 = vunpack.c.l.b16 %v1045
        %v1082 = vunpack.c.l.b16 %v1046
        %v1083 = vunpack.c.l.b16 %v1047
        %v1084 = vpack.c.b16 %v1069, %v1068
        %v1085 = vpack.c.b16 %v1071, %v1070
        %v1086 = vpack.c.b16 %v1073, %v1072
        %v1087 = vpack.c.b16 %v1075, %v1074
        %v1088 = vpack.c.b16 %v1077, %v1076
        %v1089 = vpack.c.b16 %v1079, %v1078
        %v1090 = vpack.c.b16 %v1081, %v1080
        %v1091 = vpack.c.b16 %v1083, %v1082
        %1100 = vmatpush.bf16.msra.mxu0 %v1091
        %1101 = vmatpush.bf16.msra.mxu0 %v1090
        %1102 = vmatpush.bf16.msra.mxu0 %v1089
        %1103 = vmatpush.bf16.msra.mxu0 %v1088
        %1104 = vmatpush.bf16.msra.mxu0 %v1087
        %1105 = vmatpush.bf16.msra.mxu0 %v1086
        %1106 = vmatpush.bf16.msra.mxu0 %v1085
        %1107 = vmatpush.bf16.msra.mxu0 %v1084
        %1108 = vmatmul.bf16.gmra.mxu0 %v1030
        %v1109 = vpop.f32.mrf.mxu0
        %v1110 = vadd.f32 %v1050, %v1109
        %v1111 = vpop.f32.mrf.mxu0
        %v1112 = vadd.f32 %v1050, %v1111
        %1113 = vmatmul.bf16.gmra.mxu0 %v1031
        %v1114 = vpop.f32.mrf.mxu0
        %v1115 = vadd.f32 %v1050, %v1114
        %v1116 = vpop.f32.mrf.mxu0
        %v1117 = vadd.f32 %v1050, %v1116
        %1118 = vdwg.mxu0
        %1119 = vst [vmem:[%s527] sm:$0xff] %v1110
        %1120 = vst [vmem:[%s527 + $0x8] sm:$0xff] %v1112
        %1121 = vst [vmem:[%s527 + $0x10] sm:$0xff] %v1115
        %1122 = vst [vmem:[%s527 + $0x18] sm:$0xff] %v1117
        %s1123 = sand.u32 %s279, 1
        %s1124 = scalar_lea.sflag [#allocation6], %s1123
        %s1125 = sand.u32 %s279, 1
        %s1126 = smul.addr %s1125, 32
        %s1127 = scalar_lea.vmem [#allocation15], %s1126
        // Predicated region
        $region89: #{tpu_custom_call.1} parent=55 // pred_check
          %p1128 = pneg %p289
        $region90: #{tpu_custom_call.1} parent=55 // pred_check_branch
          %1130 = sbr.rel (%p1128) target = $region92
        $region91: #{tpu_custom_call.1} parent=55 // pred_region
          %s1131 = smul.u32 4, %s36
          %1133 = vsyncadd %s1124, 0
          %s1134 = smul.addr %s35, 8
          %s1135 = sadd.s32 %s1131, %s1134
          %s1136 = smul.addr %s1135, 8
          %s1137 = scalar_lea.hbm %s9, %s1136
          %s1138 = sshll.u32 %s1127, 4
          %s1139 = int_to_ptr.vmem [resolvable:$true] %s1138
          %s1140 = sshll.u32 %s1137, 4
          %s1141 = int_to_ptr.hbm [resolvable:$true] %s1140
          %1146 = dma.vmem_to_hbm [thread:$0]  %s1139, 512, %s1141, %s1124, 128, 128, 8
        $region92: #{tpu_custom_call.1} parent=55 // pred_fallthru
          _
      $region56: #{tpu_custom_call.1} parent=5 // pred_fallthru
        _
      %p1147 = scmp.le.s32.totalorder 2, %s26
      // Predicated region
      $region93: #{tpu_custom_call.1} parent=5 // pred_check
        %p1148 = pneg %p1147
      $region94: #{tpu_custom_call.1} parent=5 // pred_check_branch
        %1150 = sbr.rel (%p1148) target = $region96
      $region95: #{tpu_custom_call.1} parent=5 // pred_region
        %s1151 = ssub.s32 %s26, 2
        // Predicated region
        $region97: #{tpu_custom_call.1} parent=95 // pred_check
          %p1152 = pneg %p295
        $region98: #{tpu_custom_call.1} parent=95 // pred_check_branch
          %1154 = sbr.rel (%p1152) target = $region100
        $region99: #{tpu_custom_call.1} parent=95 // pred_region
          %s1155 = sand.u32 %s280, 1
          %s1156 = scalar_lea.sflag [#allocation6], %s1155
          %s1157 = sand.u32 %s280, 1
          %s1158 = smul.addr %s1157, 32
          %s1159 = scalar_lea.vmem [#allocation15], %s1158
          %1161 = dma.done %s1156, 512
        $region100: #{tpu_custom_call.1} parent=95 // pred_fallthru
          _
      $region96: #{tpu_custom_call.1} parent=5 // pred_fallthru
        _
    $region6: #{tpu_custom_call.1} parent=1 // loop_footer
      %s30 = sadd.s32 1, %s26
    $region7: #{tpu_custom_call.1} parent=1 // loop_footer_branch
      %25 = sbr.rel target = $region3
    $region8: #{tpu_custom_call.1} parent=1 // loop_exit
      _
    %1162 = vsyncpa [#allocation5], 1
    %s1163 = scalar_lea.sflag [#allocation5], 1
    %1164 = vsyncpa %s1163, 1
    %1165 = vsyncpa [#allocation8], 1
    %s1166 = scalar_lea.sflag [#allocation8], 1
    %1167 = vsyncpa %s1166, 1
    %1168 = vsyncpa [#allocation11], 1
    %1169 = vsyncpa [#allocation14], 1
    %1170 = vsyncpa [#allocation6], 1
    %s1171 = scalar_lea.sflag [#allocation6], 1
    %1172 = vsyncpa %s1171, 1

</llo_original>
